<compile_context>
chip_gen: v5e
topology: v5e:2x2
jax: 0.10.0
libtpu: 0.0.40
codegen_flags: <defaults>
</compile_context>

<pallas_src>
import functools
import math

import jax
import jax.numpy as jnp
from jax.experimental import pallas as pl
from jax.experimental.pallas import tpu as pltpu

_CPARAMS = pltpu.CompilerParams(dimension_semantics=("parallel",))


# ------------------------------ spec helpers -------------------------------

def _full_spec(shape):
    """Whole-array block, same block for every grid step (weights / params)."""
    zeros = (0,) * len(shape)
    return pl.BlockSpec(tuple(shape), lambda b, _z=zeros: _z)


def _ln(x, g, b, eps=1e-5):
    """LayerNorm over the last axis, f32 throughout. x: (M, D); g, b: (1, D)."""
    mean = jnp.mean(x, axis=-1, keepdims=True)
    var = jnp.mean(jnp.square(x - mean), axis=-1, keepdims=True)
    return (x - mean) * jax.lax.rsqrt(var + eps) * g + b


# ----------------------------- fused Pallas kernel --------------------------

def _fused_kernel(patches_ref, prompts_ref, wpatch_ref, pos_ref,
                  lnpre_g_ref, lnpre_b_ref,
                  ln1g_ref, ln1b_ref, wqkv_ref, bqkv_ref,
                  wout_ref, bout_ref, ln2g_ref, ln2b_ref,
                  wfc_ref, bfc_ref, wproj_ref, bproj_ref,
                  lnpost_g_ref, lnpost_b_ref, proj_ref,
                  o_ref, *, bt, nt, n_head):
    """Whole VisualGenerator forward for one block of `bt` batch elements."""
    f32, bf16 = jnp.float32, jnp.bfloat16
    N, D = pos_ref.shape
    CPP = patches_ref.shape[2]
    L = wqkv_ref.shape[0]
    S = nt + N
    M = bt * S
    dh = D // n_head
    scale = 1.0 / math.sqrt(dh)

    # --- incorporate_prompt: conv1(stride==kernel) as one (Bt*N,CPP)@(CPP,D)
    #     matmul, + positional_embedding[1:], prepend prompts, shared ln_pre.
    #     (Matches the reference: prompts get no positional embedding and
    #     pos_emb[0] / class token is unused.)
    patches = patches_ref[...].reshape(bt * N, CPP)                  # bf16
    emb = jnp.dot(patches, wpatch_ref[...], preferred_element_type=f32)
    emb = emb.reshape(bt, N, D) + pos_ref[...]                       # f32
    prm = jnp.broadcast_to(prompts_ref[...].reshape(1, nt, D), (bt, nt, D))
    x = jnp.concatenate([prm, emb], axis=1).reshape(M, D)            # (Bt*S, D)
    x = _ln(x, lnpre_g_ref[...], lnpre_b_ref[...])

    # --- vit.transformer: stack of fused ResidualAttentionBlocks (static L).
    for l in range(L):
        # ----- multi-head self-attention (pre-LN) -----
        h = _ln(x, ln1g_ref[l], ln1b_ref[l])
        qkv = jnp.dot(h.astype(bf16), wqkv_ref[l],
                      preferred_element_type=f32) + bqkv_ref[l]      # (M, 3D)
        q3 = (qkv[:, :D] * scale).reshape(bt, S, D)    # scale folded into q
        k3 = qkv[:, D:2 * D].reshape(bt, S, D)
        v3 = qkv[:, 2 * D:].reshape(bt, S, D)
        # Heads: static loop, but every einsum is batched over the Bt batch
        # elements, softmax is exact f32, and the head-concat hits W_out with
        # ONE (M, D) @ (D, D) matmul (no per-head accumulate chain).
        # TODO(synk): at real scale fold heads into a (Bt*H) leading batch dim
        # (needs a 4-D relayout / per-head grid axis).
        ctx = []
        for hd in range(n_head):
            lo = hd * dh
            qh = q3[:, :, lo:lo + dh].astype(bf16)
            kh = k3[:, :, lo:lo + dh].astype(bf16)
            vh = v3[:, :, lo:lo + dh].astype(bf16)
            s = jnp.einsum('bqd,bkd->bqk', qh, kh,
                           preferred_element_type=f32)               # (Bt,S,S)
            s = s - jnp.max(s, axis=-1, keepdims=True)
            p = jnp.exp(s)
            p = p / jnp.sum(p, axis=-1, keepdims=True)               # exact
            ctx.append(jnp.einsum('bqk,bkd->bqd', p.astype(bf16), vh,
                                  preferred_element_type=f32))
        ctx = jnp.concatenate(ctx, axis=-1).reshape(M, D)
        x = x + jnp.dot(ctx.astype(bf16), wout_ref[l],
                        preferred_element_type=f32) + bout_ref[l]

        # ----- MLP (pre-LN) with QuickGELU -----
        h = _ln(x, ln2g_ref[l], ln2b_ref[l])
        h = jnp.dot(h.astype(bf16), wfc_ref[l],
                    preferred_element_type=f32) + bfc_ref[l]
        h = h * jax.nn.sigmoid(1.702 * h)                            # QuickGELU
        x = x + jnp.dot(h.astype(bf16), wproj_ref[l],
                        preferred_element_type=f32) + bproj_ref[l]

    # --- vit.ln_post(x[:, :num_tokens, :]) @ proj
    E = proj_ref.shape[1]
    t = x.reshape(bt, S, D)[:, :nt, :].reshape(bt * nt, D)
    t = _ln(t, lnpost_g_ref[...], lnpost_b_ref[...])
    out = jnp.dot(t.astype(bf16), proj_ref[...], preferred_element_type=f32)
    # TODO(synk): E=32 makes this a masked (non lane-dense) store; at CLIP
    # scale (E=768) the output slab is lane-dense.
    o_ref[...] = out.reshape(bt, nt, E)


# ------------------------------ kernel wrapper ------------------------------

def _fused_call(patches, prompts, params, *, nt, n_head):
    B, N, CPP = patches.shape
    E = params['gen_proj'].shape[-1]
    # 2 "parallel" grid steps when possible so both v7x TensorCores get real
    # work; each step folds its Bt batch elements into the matmul M dimension.
    n_blocks = 2 if (B >= 2 and B % 2 == 0) else 1
    bt = B // n_blocks

    weight_args = (prompts, params['patch_w'], params['pos_emb_patch'],
                   params['ln_pre_g'], params['ln_pre_b'],
                   params['ln1_g'], params['ln1_b'],
                   params['w_qkv'], params['b_qkv'],
                   params['w_out'], params['b_out'],
                   params['ln2_g'], params['ln2_b'],
                   params['w_fc'], params['b_fc'],
                   params['w_proj'], params['b_proj'],
                   params['gen_ln_post_g'], params['gen_ln_post_b'],
                   params['gen_proj'])
    in_specs = ([pl.BlockSpec((bt, N, CPP), lambda b: (b, 0, 0))]
                + [_full_spec(a.shape) for a in weight_args])
    return pl.pallas_call(
        functools.partial(_fused_kernel, bt=bt, nt=nt, n_head=n_head),
        grid=(n_blocks,),
        in_specs=in_specs,
        out_specs=pl.BlockSpec((bt, nt, E), lambda b: (b, 0, 0)),
        out_shape=jax.ShapeDtypeStruct((B, nt, E), jnp.float32),
        compiler_params=_CPARAMS,
    )(patches, *weight_args)


# ------------------------------ forward pass --------------------------------

def _patchify(x_nchw, patch):
    """Stride==kernel Conv2d lowered to patch extraction (flattened (C,ph,pw))."""
    B, C, H, W = x_nchw.shape
    gh, gw = H // patch, W // patch
    p = x_nchw.reshape(B, C, gh, patch, gw, patch)
    return p.transpose(0, 2, 4, 1, 3, 5).reshape(B, gh * gw, C * patch * patch)


def visual_generator_forward(x_img, prompt_embeddings, params, *,
                             n_head=4, patch_size=8):
    """VisualGenerator.forward (generator_layer>=1, no domain-specific trick)."""
    B = x_img.shape[0]
    nt = prompt_embeddings.shape[-2]
    D = prompt_embeddings.shape[-1]
    L = params['w_qkv'].shape[0]

    if L == 0:                                    # generator_layer == 0 path
        return jnp.broadcast_to(
            prompt_embeddings.reshape(1, nt, D).astype(jnp.float32), (B, nt, D))

    # TODO(synk): domain_specific_trick (training-time masked_fill of sdp/scp
    # prompts) is not exercised; config fixes domain_specific_trick=False.
    # TODO(synk): at real image sizes fold the patch gather into the kernel's
    # DMA via an index_map; at 16x16 this single XLA shuffle is negligible and
    # is fused into the surrounding jit.
    patches = _patchify(x_img, patch_size).astype(jnp.bfloat16)   # (B,N,C*p*p)
    prompts = prompt_embeddings.reshape(nt, D).astype(jnp.float32)
    return _fused_call(patches, prompts, params, nt=nt, n_head=n_head)


# --------------------------- deterministic init ----------------------------

def init_params(key, *, width=32, patch=8, in_ch=3, img=16, gen_layers=1):
    f32, bf16 = jnp.float32, jnp.bfloat16
    d = width
    n_patches = (img // patch) ** 2
    cpp = in_ch * patch * patch
    L = gen_layers
    ks = jax.random.split(key, 9)

    def nrm(k, shape, s=0.05):
        return s * jax.random.normal(k, shape, f32)

    conv_w = 0.02 * jax.random.normal(ks[0], (d, cpp), f32)       # (width, C*p*p)
    pos_full = 0.02 * jax.random.normal(ks[1], (1 + n_patches, d), f32)
    scale = d ** -0.5
    # MXU-facing weights stored pre-transposed (in, out) and in bf16; biases /
    # LN params / positional embedding stay f32 (elementwise math stays f32).
    return {
        'patch_w': conv_w.T.astype(bf16),                         # (C*p*p, width)
        'pos_emb_patch': pos_full[1:],                            # pos_emb[1:] hoisted once
        'ln_pre_g': jnp.ones((1, d), f32), 'ln_pre_b': jnp.zeros((1, d), f32),
        'ln1_g': jnp.ones((L, 1, d), f32), 'ln1_b': jnp.zeros((L, 1, d), f32),
        'w_qkv': nrm(ks[2], (L, d, 3 * d)).astype(bf16),
        'b_qkv': nrm(ks[3], (L, 1, 3 * d), 0.02),
        'w_out': nrm(ks[4], (L, d, d)).astype(bf16),
        'b_out': jnp.zeros((L, 1, d), f32),
        'ln2_g': jnp.ones((L, 1, d), f32), 'ln2_b': jnp.zeros((L, 1, d), f32),
        'w_fc': nrm(ks[5], (L, d, 4 * d)).astype(bf16),
        'b_fc': nrm(ks[6], (L, 1, 4 * d), 0.02),
        'w_proj': nrm(ks[7], (L, 4 * d, d)).astype(bf16),
        'b_proj': jnp.zeros((L, 1, d), f32),
        'gen_ln_post_g': jnp.ones((1, d), f32),
        'gen_ln_post_b': jnp.zeros((1, d), f32),
        'gen_proj': (scale * jax.random.normal(ks[8], (d, d), f32)).astype(bf16),
    }


if __name__ == "__main__":
    key = jax.random.PRNGKey(0)
    k_x, k_prompt, k_params = jax.random.split(key, 3)

    B, C, H, W = 2, 3, 16, 16
    width, num_tokens, patch, n_head = 32, 2, 8, 4

    x = jax.random.normal(k_x, (B, C, H, W), jnp.float32)         # NCHW images
    # prompts initialized with the module's xavier-style uniform bound
    val = math.sqrt(6.0 / float(3 * patch * patch + width))
    prompt_embeddings = jax.random.uniform(
        k_prompt, (1, num_tokens, width), jnp.float32, -val, val)
    params = init_params(k_params, width=width, patch=patch, in_ch=C, img=H,
                         gen_layers=1)

    fwd = jax.jit(functools.partial(visual_generator_forward,
                                    n_head=n_head, patch_size=patch))
    out = jax.block_until_ready(fwd(x, prompt_embeddings, params))

    assert out.shape == (B, num_tokens, width), out.shape
    assert bool(jnp.all(jnp.isfinite(out)))
    print("KERNEL_OK")
</pallas_src>

<mosaic_0001>
module attributes {stable_mosaic.version = 11 : i64} {
  func.func @_fused_kernel(%arg0: i32, %arg1: memref<1x4x192xbf16, #tpu.memory_space<vmem>>, %arg2: memref<2x32xf32, #tpu.memory_space<vmem>>, %arg3: memref<192x32xbf16, #tpu.memory_space<vmem>>, %arg4: memref<4x32xf32, #tpu.memory_space<vmem>>, %arg5: memref<1x32xf32, #tpu.memory_space<vmem>>, %arg6: memref<1x32xf32, #tpu.memory_space<vmem>>, %arg7: memref<1x1x32xf32, #tpu.memory_space<vmem>>, %arg8: memref<1x1x32xf32, #tpu.memory_space<vmem>>, %arg9: memref<1x32x96xbf16, #tpu.memory_space<vmem>>, %arg10: memref<1x1x96xf32, #tpu.memory_space<vmem>>, %arg11: memref<1x32x32xbf16, #tpu.memory_space<vmem>>, %arg12: memref<1x1x32xf32, #tpu.memory_space<vmem>>, %arg13: memref<1x1x32xf32, #tpu.memory_space<vmem>>, %arg14: memref<1x1x32xf32, #tpu.memory_space<vmem>>, %arg15: memref<1x32x128xbf16, #tpu.memory_space<vmem>>, %arg16: memref<1x1x128xf32, #tpu.memory_space<vmem>>, %arg17: memref<1x128x32xbf16, #tpu.memory_space<vmem>>, %arg18: memref<1x1x32xf32, #tpu.memory_space<vmem>>, %arg19: memref<1x32xf32, #tpu.memory_space<vmem>>, %arg20: memref<1x32xf32, #tpu.memory_space<vmem>>, %arg21: memref<32x32xbf16, #tpu.memory_space<vmem>>, %arg22: memref<1x2x32xf32, #tpu.memory_space<vmem>>) attributes {dimension_semantics = [#tpu.dimension_semantics<parallel>], iteration_bounds = array<i64: 2>, scalar_prefetch = 0 : i64, scratch_operands = 0 : i64, tpu.core_type = #tpu.core_type<tc>, window_params = [{transform_indices = @transform_0, window_bounds = array<i64: 1, 4, 192>}, {pipeline_mode = #tpu.pipeline_mode<synchronous>, transform_indices = @transform_1, window_bounds = array<i64: 2, 32>}, {pipeline_mode = #tpu.pipeline_mode<synchronous>, transform_indices = @transform_2, window_bounds = array<i64: 192, 32>}, {pipeline_mode = #tpu.pipeline_mode<synchronous>, transform_indices = @transform_3, window_bounds = array<i64: 4, 32>}, {pipeline_mode = #tpu.pipeline_mode<synchronous>, transform_indices = @transform_4, window_bounds = array<i64: 1, 32>}, {pipeline_mode = #tpu.pipeline_mode<synchronous>, transform_indices = @transform_5, window_bounds = array<i64: 1, 32>}, {pipeline_mode = #tpu.pipeline_mode<synchronous>, transform_indices = @transform_6, window_bounds = array<i64: 1, 1, 32>}, {pipeline_mode = #tpu.pipeline_mode<synchronous>, transform_indices = @transform_7, window_bounds = array<i64: 1, 1, 32>}, {pipeline_mode = #tpu.pipeline_mode<synchronous>, transform_indices = @transform_8, window_bounds = array<i64: 1, 32, 96>}, {pipeline_mode = #tpu.pipeline_mode<synchronous>, transform_indices = @transform_9, window_bounds = array<i64: 1, 1, 96>}, {pipeline_mode = #tpu.pipeline_mode<synchronous>, transform_indices = @transform_10, window_bounds = array<i64: 1, 32, 32>}, {pipeline_mode = #tpu.pipeline_mode<synchronous>, transform_indices = @transform_11, window_bounds = array<i64: 1, 1, 32>}, {pipeline_mode = #tpu.pipeline_mode<synchronous>, transform_indices = @transform_12, window_bounds = array<i64: 1, 1, 32>}, {pipeline_mode = #tpu.pipeline_mode<synchronous>, transform_indices = @transform_13, window_bounds = array<i64: 1, 1, 32>}, {pipeline_mode = #tpu.pipeline_mode<synchronous>, transform_indices = @transform_14, window_bounds = array<i64: 1, 32, 128>}, {pipeline_mode = #tpu.pipeline_mode<synchronous>, transform_indices = @transform_15, window_bounds = array<i64: 1, 1, 128>}, {pipeline_mode = #tpu.pipeline_mode<synchronous>, transform_indices = @transform_16, window_bounds = array<i64: 1, 128, 32>}, {pipeline_mode = #tpu.pipeline_mode<synchronous>, transform_indices = @transform_17, window_bounds = array<i64: 1, 1, 32>}, {pipeline_mode = #tpu.pipeline_mode<synchronous>, transform_indices = @transform_18, window_bounds = array<i64: 1, 32>}, {pipeline_mode = #tpu.pipeline_mode<synchronous>, transform_indices = @transform_19, window_bounds = array<i64: 1, 32>}, {pipeline_mode = #tpu.pipeline_mode<synchronous>, transform_indices = @transform_20, window_bounds = array<i64: 32, 32>}, {transform_indices = @transform_21, window_bounds = array<i64: 1, 2, 32>}]} {
    %c0 = arith.constant 0 : index
    %c0_0 = arith.constant 0 : index
    %c0_1 = arith.constant 0 : index
    %0 = vector.load %arg1[%c0, %c0_0, %c0_1] : memref<1x4x192xbf16, #tpu.memory_space<vmem>>, vector<1x4x192xbf16>
    %1 = vector.shape_cast %0 : vector<1x4x192xbf16> to vector<4x192xbf16>
    %c0_2 = arith.constant 0 : index
    %c0_3 = arith.constant 0 : index
    %2 = vector.load %arg3[%c0_2, %c0_3] : memref<192x32xbf16, #tpu.memory_space<vmem>>, vector<192x32xbf16>
    %cst = arith.constant dense<0.000000e+00> : vector<4x32xf32>
    %3 = tpu.matmul %1, %2, %cst {dimension_numbers = #tpu.dot_dimension_numbers<[1], [0], [0], [1], [0, 0, 1, 1], [], []>} : vector<4x192xbf16>, vector<192x32xbf16>, vector<4x32xf32> -> vector<4x32xf32>
    %4 = vector.shape_cast %3 : vector<4x32xf32> to vector<1x4x32xf32>
    %c0_4 = arith.constant 0 : index
    %c0_5 = arith.constant 0 : index
    %5 = vector.load %arg4[%c0_4, %c0_5] : memref<4x32xf32, #tpu.memory_space<vmem>>, vector<4x32xf32>
    %6 = vector.shape_cast %5 : vector<4x32xf32> to vector<1x4x32xf32>
    %7 = arith.addf %4, %6 : vector<1x4x32xf32>
    %c0_6 = arith.constant 0 : index
    %c0_7 = arith.constant 0 : index
    %8 = vector.load %arg2[%c0_6, %c0_7] : memref<2x32xf32, #tpu.memory_space<vmem>>, vector<2x32xf32>
    %9 = vector.shape_cast %8 : vector<2x32xf32> to vector<1x2x32xf32>
    %10 = tpu.concatenate %9, %7 in 1 : vector<1x2x32xf32>, vector<1x4x32xf32> -> vector<1x6x32xf32>
    %11 = vector.shape_cast %10 : vector<1x6x32xf32> to vector<6x32xf32>
    %c0_8 = arith.constant 0 : index
    %c0_9 = arith.constant 0 : index
    %12 = vector.load %arg5[%c0_8, %c0_9] : memref<1x32xf32, #tpu.memory_space<vmem>>, vector<1x32xf32>
    %c0_10 = arith.constant 0 : index
    %c0_11 = arith.constant 0 : index
    %13 = vector.load %arg6[%c0_10, %c0_11] : memref<1x32xf32, #tpu.memory_space<vmem>>, vector<1x32xf32>
    %cst_12 = arith.constant dense<0.000000e+00> : vector<6xf32>
    %14 = vector.multi_reduction <add>, %11, %cst_12 [1] : vector<6x32xf32> to vector<6xf32>
    %15 = vector.shape_cast %14 : vector<6xf32> to vector<6x1xf32>
    %cst_13 = arith.constant 3.200000e+01 : f32
    %16 = vector.broadcast %cst_13 : f32 to vector<6x1xf32>
    %17 = arith.divf %15, %16 : vector<6x1xf32>
    %18 = vector.broadcast %17 : vector<6x1xf32> to vector<6x32xf32>
    %19 = arith.subf %11, %18 : vector<6x32xf32>
    %20 = arith.mulf %19, %19 : vector<6x32xf32>
    %cst_14 = arith.constant dense<0.000000e+00> : vector<6xf32>
    %21 = vector.multi_reduction <add>, %20, %cst_14 [1] : vector<6x32xf32> to vector<6xf32>
    %22 = vector.shape_cast %21 : vector<6xf32> to vector<6x1xf32>
    %cst_15 = arith.constant 3.200000e+01 : f32
    %23 = vector.broadcast %cst_15 : f32 to vector<6x1xf32>
    %24 = arith.divf %22, %23 : vector<6x1xf32>
    %25 = vector.broadcast %17 : vector<6x1xf32> to vector<6x32xf32>
    %26 = arith.subf %11, %25 : vector<6x32xf32>
    %cst_16 = arith.constant 9.99999974E-6 : f32
    %27 = vector.broadcast %cst_16 : f32 to vector<6x1xf32>
    %28 = arith.addf %24, %27 : vector<6x1xf32>
    %29 = math.rsqrt %28 : vector<6x1xf32>
    %30 = vector.broadcast %29 : vector<6x1xf32> to vector<6x32xf32>
    %31 = arith.mulf %26, %30 : vector<6x32xf32>
    %32 = vector.broadcast %12 : vector<1x32xf32> to vector<6x32xf32>
    %33 = arith.mulf %31, %32 : vector<6x32xf32>
    %34 = vector.broadcast %13 : vector<1x32xf32> to vector<6x32xf32>
    %35 = arith.addf %33, %34 : vector<6x32xf32>
    %c0_17 = arith.constant 0 : index
    %c0_18 = arith.constant 0 : index
    %c0_19 = arith.constant 0 : index
    %36 = vector.load %arg7[%c0_17, %c0_18, %c0_19] : memref<1x1x32xf32, #tpu.memory_space<vmem>>, vector<1x1x32xf32>
    %37 = vector.shape_cast %36 : vector<1x1x32xf32> to vector<1x32xf32>
    %c0_20 = arith.constant 0 : index
    %c0_21 = arith.constant 0 : index
    %c0_22 = arith.constant 0 : index
    %38 = vector.load %arg8[%c0_20, %c0_21, %c0_22] : memref<1x1x32xf32, #tpu.memory_space<vmem>>, vector<1x1x32xf32>
    %39 = vector.shape_cast %38 : vector<1x1x32xf32> to vector<1x32xf32>
    %cst_23 = arith.constant dense<0.000000e+00> : vector<6xf32>
    %40 = vector.multi_reduction <add>, %35, %cst_23 [1] : vector<6x32xf32> to vector<6xf32>
    %41 = vector.shape_cast %40 : vector<6xf32> to vector<6x1xf32>
    %cst_24 = arith.constant 3.200000e+01 : f32
    %42 = vector.broadcast %cst_24 : f32 to vector<6x1xf32>
    %43 = arith.divf %41, %42 : vector<6x1xf32>
    %44 = vector.broadcast %43 : vector<6x1xf32> to vector<6x32xf32>
    %45 = arith.subf %35, %44 : vector<6x32xf32>
    %46 = arith.mulf %45, %45 : vector<6x32xf32>
    %cst_25 = arith.constant dense<0.000000e+00> : vector<6xf32>
    %47 = vector.multi_reduction <add>, %46, %cst_25 [1] : vector<6x32xf32> to vector<6xf32>
    %48 = vector.shape_cast %47 : vector<6xf32> to vector<6x1xf32>
    %cst_26 = arith.constant 3.200000e+01 : f32
    %49 = vector.broadcast %cst_26 : f32 to vector<6x1xf32>
    %50 = arith.divf %48, %49 : vector<6x1xf32>
    %51 = vector.broadcast %43 : vector<6x1xf32> to vector<6x32xf32>
    %52 = arith.subf %35, %51 : vector<6x32xf32>
    %cst_27 = arith.constant 9.99999974E-6 : f32
    %53 = vector.broadcast %cst_27 : f32 to vector<6x1xf32>
    %54 = arith.addf %50, %53 : vector<6x1xf32>
    %55 = math.rsqrt %54 : vector<6x1xf32>
    %56 = vector.broadcast %55 : vector<6x1xf32> to vector<6x32xf32>
    %57 = arith.mulf %52, %56 : vector<6x32xf32>
    %58 = vector.broadcast %37 : vector<1x32xf32> to vector<6x32xf32>
    %59 = arith.mulf %57, %58 : vector<6x32xf32>
    %60 = vector.broadcast %39 : vector<1x32xf32> to vector<6x32xf32>
    %61 = arith.addf %59, %60 : vector<6x32xf32>
    %62 = arith.truncf %61 : vector<6x32xf32> to vector<6x32xbf16>
    %c0_28 = arith.constant 0 : index
    %c0_29 = arith.constant 0 : index
    %c0_30 = arith.constant 0 : index
    %63 = vector.load %arg9[%c0_28, %c0_29, %c0_30] : memref<1x32x96xbf16, #tpu.memory_space<vmem>>, vector<1x32x96xbf16>
    %64 = vector.shape_cast %63 : vector<1x32x96xbf16> to vector<32x96xbf16>
    %cst_31 = arith.constant dense<0.000000e+00> : vector<6x96xf32>
    %65 = tpu.matmul %62, %64, %cst_31 {dimension_numbers = #tpu.dot_dimension_numbers<[1], [0], [0], [1], [0, 0, 1, 1], [], []>} : vector<6x32xbf16>, vector<32x96xbf16>, vector<6x96xf32> -> vector<6x96xf32>
    %c0_32 = arith.constant 0 : index
    %c0_33 = arith.constant 0 : index
    %c0_34 = arith.constant 0 : index
    %66 = vector.load %arg10[%c0_32, %c0_33, %c0_34] : memref<1x1x96xf32, #tpu.memory_space<vmem>>, vector<1x1x96xf32>
    %67 = vector.shape_cast %66 : vector<1x1x96xf32> to vector<1x96xf32>
    %68 = vector.broadcast %67 : vector<1x96xf32> to vector<6x96xf32>
    %69 = arith.addf %65, %68 : vector<6x96xf32>
    %70 = vector.extract_strided_slice %69 {offsets = [0, 0], sizes = [6, 32], strides = [1, 1]} : vector<6x96xf32> to vector<6x32xf32>
    %cst_35 = arith.constant 0.353553385 : f32
    %71 = vector.broadcast %cst_35 : f32 to vector<6x32xf32>
    %72 = arith.mulf %70, %71 : vector<6x32xf32>
    %73 = vector.shape_cast %72 : vector<6x32xf32> to vector<1x6x32xf32>
    %74 = vector.extract_strided_slice %69 {offsets = [0, 32], sizes = [6, 32], strides = [1, 1]} : vector<6x96xf32> to vector<6x32xf32>
    %75 = vector.shape_cast %74 : vector<6x32xf32> to vector<1x6x32xf32>
    %76 = vector.extract_strided_slice %69 {offsets = [0, 64], sizes = [6, 32], strides = [1, 1]} : vector<6x96xf32> to vector<6x32xf32>
    %77 = vector.shape_cast %76 : vector<6x32xf32> to vector<1x6x32xf32>
    %78 = vector.extract_strided_slice %73 {offsets = [0, 0, 0], sizes = [1, 6, 8], strides = [1, 1, 1]} : vector<1x6x32xf32> to vector<1x6x8xf32>
    %79 = arith.truncf %78 : vector<1x6x8xf32> to vector<1x6x8xbf16>
    %80 = vector.extract_strided_slice %75 {offsets = [0, 0, 0], sizes = [1, 6, 8], strides = [1, 1, 1]} : vector<1x6x32xf32> to vector<1x6x8xf32>
    %81 = arith.truncf %80 : vector<1x6x8xf32> to vector<1x6x8xbf16>
    %82 = vector.extract_strided_slice %77 {offsets = [0, 0, 0], sizes = [1, 6, 8], strides = [1, 1, 1]} : vector<1x6x32xf32> to vector<1x6x8xf32>
    %83 = arith.truncf %82 : vector<1x6x8xf32> to vector<1x6x8xbf16>
    "tpu.trace_start"() <{level = 10 : i32, message = "bqd,bkd->bqk"}> : () -> ()
    %cst_36 = arith.constant dense<0.000000e+00> : vector<1x6x6xf32>
    %84 = tpu.matmul %79, %81, %cst_36 {dimension_numbers = #tpu.dot_dimension_numbers<[2], [2], [1], [1], [0, 0, 0, 1, 1, 1], [0], [0]>} : vector<1x6x8xbf16>, vector<1x6x8xbf16>, vector<1x6x6xf32> -> vector<1x6x6xf32>
    "tpu.trace_stop"() : () -> ()
    %cst_37 = arith.constant dense<0xFF800000> : vector<1x6xf32>
    %85 = vector.multi_reduction <maximumf>, %84, %cst_37 [2] : vector<1x6x6xf32> to vector<1x6xf32>
    %86 = vector.shape_cast %85 : vector<1x6xf32> to vector<1x6x1xf32>
    %87 = vector.broadcast %86 : vector<1x6x1xf32> to vector<1x6x6xf32>
    %88 = arith.subf %84, %87 : vector<1x6x6xf32>
    %89 = math.exp %88 : vector<1x6x6xf32>
    %cst_38 = arith.constant dense<0.000000e+00> : vector<1x6xf32>
    %90 = vector.multi_reduction <add>, %89, %cst_38 [2] : vector<1x6x6xf32> to vector<1x6xf32>
    %91 = vector.shape_cast %90 : vector<1x6xf32> to vector<1x6x1xf32>
    %92 = vector.broadcast %91 : vector<1x6x1xf32> to vector<1x6x6xf32>
    %93 = arith.divf %89, %92 : vector<1x6x6xf32>
    %94 = arith.truncf %93 : vector<1x6x6xf32> to vector<1x6x6xbf16>
    "tpu.trace_start"() <{level = 10 : i32, message = "bqk,bkd->bqd"}> : () -> ()
    %cst_39 = arith.constant dense<0.000000e+00> : vector<1x6x8xf32>
    %95 = tpu.matmul %94, %83, %cst_39 {dimension_numbers = #tpu.dot_dimension_numbers<[2], [1], [1], [2], [0, 0, 0, 1, 1, 2], [0], [0]>} : vector<1x6x6xbf16>, vector<1x6x8xbf16>, vector<1x6x8xf32> -> vector<1x6x8xf32>
    "tpu.trace_stop"() : () -> ()
    %96 = vector.extract_strided_slice %73 {offsets = [0, 0, 8], sizes = [1, 6, 8], strides = [1, 1, 1]} : vector<1x6x32xf32> to vector<1x6x8xf32>
    %97 = arith.truncf %96 : vector<1x6x8xf32> to vector<1x6x8xbf16>
    %98 = vector.extract_strided_slice %75 {offsets = [0, 0, 8], sizes = [1, 6, 8], strides = [1, 1, 1]} : vector<1x6x32xf32> to vector<1x6x8xf32>
    %99 = arith.truncf %98 : vector<1x6x8xf32> to vector<1x6x8xbf16>
    %100 = vector.extract_strided_slice %77 {offsets = [0, 0, 8], sizes = [1, 6, 8], strides = [1, 1, 1]} : vector<1x6x32xf32> to vector<1x6x8xf32>
    %101 = arith.truncf %100 : vector<1x6x8xf32> to vector<1x6x8xbf16>
    "tpu.trace_start"() <{level = 10 : i32, message = "bqd,bkd->bqk"}> : () -> ()
    %cst_40 = arith.constant dense<0.000000e+00> : vector<1x6x6xf32>
    %102 = tpu.matmul %97, %99, %cst_40 {dimension_numbers = #tpu.dot_dimension_numbers<[2], [2], [1], [1], [0, 0, 0, 1, 1, 1], [0], [0]>} : vector<1x6x8xbf16>, vector<1x6x8xbf16>, vector<1x6x6xf32> -> vector<1x6x6xf32>
    "tpu.trace_stop"() : () -> ()
    %cst_41 = arith.constant dense<0xFF800000> : vector<1x6xf32>
    %103 = vector.multi_reduction <maximumf>, %102, %cst_41 [2] : vector<1x6x6xf32> to vector<1x6xf32>
    %104 = vector.shape_cast %103 : vector<1x6xf32> to vector<1x6x1xf32>
    %105 = vector.broadcast %104 : vector<1x6x1xf32> to vector<1x6x6xf32>
    %106 = arith.subf %102, %105 : vector<1x6x6xf32>
    %107 = math.exp %106 : vector<1x6x6xf32>
    %cst_42 = arith.constant dense<0.000000e+00> : vector<1x6xf32>
    %108 = vector.multi_reduction <add>, %107, %cst_42 [2] : vector<1x6x6xf32> to vector<1x6xf32>
    %109 = vector.shape_cast %108 : vector<1x6xf32> to vector<1x6x1xf32>
    %110 = vector.broadcast %109 : vector<1x6x1xf32> to vector<1x6x6xf32>
    %111 = arith.divf %107, %110 : vector<1x6x6xf32>
    %112 = arith.truncf %111 : vector<1x6x6xf32> to vector<1x6x6xbf16>
    "tpu.trace_start"() <{level = 10 : i32, message = "bqk,bkd->bqd"}> : () -> ()
    %cst_43 = arith.constant dense<0.000000e+00> : vector<1x6x8xf32>
    %113 = tpu.matmul %112, %101, %cst_43 {dimension_numbers = #tpu.dot_dimension_numbers<[2], [1], [1], [2], [0, 0, 0, 1, 1, 2], [0], [0]>} : vector<1x6x6xbf16>, vector<1x6x8xbf16>, vector<1x6x8xf32> -> vector<1x6x8xf32>
    "tpu.trace_stop"() : () -> ()
    %114 = vector.extract_strided_slice %73 {offsets = [0, 0, 16], sizes = [1, 6, 8], strides = [1, 1, 1]} : vector<1x6x32xf32> to vector<1x6x8xf32>
    %115 = arith.truncf %114 : vector<1x6x8xf32> to vector<1x6x8xbf16>
    %116 = vector.extract_strided_slice %75 {offsets = [0, 0, 16], sizes = [1, 6, 8], strides = [1, 1, 1]} : vector<1x6x32xf32> to vector<1x6x8xf32>
    %117 = arith.truncf %116 : vector<1x6x8xf32> to vector<1x6x8xbf16>
    %118 = vector.extract_strided_slice %77 {offsets = [0, 0, 16], sizes = [1, 6, 8], strides = [1, 1, 1]} : vector<1x6x32xf32> to vector<1x6x8xf32>
    %119 = arith.truncf %118 : vector<1x6x8xf32> to vector<1x6x8xbf16>
    "tpu.trace_start"() <{level = 10 : i32, message = "bqd,bkd->bqk"}> : () -> ()
    %cst_44 = arith.constant dense<0.000000e+00> : vector<1x6x6xf32>
    %120 = tpu.matmul %115, %117, %cst_44 {dimension_numbers = #tpu.dot_dimension_numbers<[2], [2], [1], [1], [0, 0, 0, 1, 1, 1], [0], [0]>} : vector<1x6x8xbf16>, vector<1x6x8xbf16>, vector<1x6x6xf32> -> vector<1x6x6xf32>
    "tpu.trace_stop"() : () -> ()
    %cst_45 = arith.constant dense<0xFF800000> : vector<1x6xf32>
    %121 = vector.multi_reduction <maximumf>, %120, %cst_45 [2] : vector<1x6x6xf32> to vector<1x6xf32>
    %122 = vector.shape_cast %121 : vector<1x6xf32> to vector<1x6x1xf32>
    %123 = vector.broadcast %122 : vector<1x6x1xf32> to vector<1x6x6xf32>
    %124 = arith.subf %120, %123 : vector<1x6x6xf32>
    %125 = math.exp %124 : vector<1x6x6xf32>
    %cst_46 = arith.constant dense<0.000000e+00> : vector<1x6xf32>
    %126 = vector.multi_reduction <add>, %125, %cst_46 [2] : vector<1x6x6xf32> to vector<1x6xf32>
    %127 = vector.shape_cast %126 : vector<1x6xf32> to vector<1x6x1xf32>
    %128 = vector.broadcast %127 : vector<1x6x1xf32> to vector<1x6x6xf32>
    %129 = arith.divf %125, %128 : vector<1x6x6xf32>
    %130 = arith.truncf %129 : vector<1x6x6xf32> to vector<1x6x6xbf16>
    "tpu.trace_start"() <{level = 10 : i32, message = "bqk,bkd->bqd"}> : () -> ()
    %cst_47 = arith.constant dense<0.000000e+00> : vector<1x6x8xf32>
    %131 = tpu.matmul %130, %119, %cst_47 {dimension_numbers = #tpu.dot_dimension_numbers<[2], [1], [1], [2], [0, 0, 0, 1, 1, 2], [0], [0]>} : vector<1x6x6xbf16>, vector<1x6x8xbf16>, vector<1x6x8xf32> -> vector<1x6x8xf32>
    "tpu.trace_stop"() : () -> ()
    %132 = vector.extract_strided_slice %73 {offsets = [0, 0, 24], sizes = [1, 6, 8], strides = [1, 1, 1]} : vector<1x6x32xf32> to vector<1x6x8xf32>
    %133 = arith.truncf %132 : vector<1x6x8xf32> to vector<1x6x8xbf16>
    %134 = vector.extract_strided_slice %75 {offsets = [0, 0, 24], sizes = [1, 6, 8], strides = [1, 1, 1]} : vector<1x6x32xf32> to vector<1x6x8xf32>
    %135 = arith.truncf %134 : vector<1x6x8xf32> to vector<1x6x8xbf16>
    %136 = vector.extract_strided_slice %77 {offsets = [0, 0, 24], sizes = [1, 6, 8], strides = [1, 1, 1]} : vector<1x6x32xf32> to vector<1x6x8xf32>
    %137 = arith.truncf %136 : vector<1x6x8xf32> to vector<1x6x8xbf16>
    "tpu.trace_start"() <{level = 10 : i32, message = "bqd,bkd->bqk"}> : () -> ()
    %cst_48 = arith.constant dense<0.000000e+00> : vector<1x6x6xf32>
    %138 = tpu.matmul %133, %135, %cst_48 {dimension_numbers = #tpu.dot_dimension_numbers<[2], [2], [1], [1], [0, 0, 0, 1, 1, 1], [0], [0]>} : vector<1x6x8xbf16>, vector<1x6x8xbf16>, vector<1x6x6xf32> -> vector<1x6x6xf32>
    "tpu.trace_stop"() : () -> ()
    %cst_49 = arith.constant dense<0xFF800000> : vector<1x6xf32>
    %139 = vector.multi_reduction <maximumf>, %138, %cst_49 [2] : vector<1x6x6xf32> to vector<1x6xf32>
    %140 = vector.shape_cast %139 : vector<1x6xf32> to vector<1x6x1xf32>
    %141 = vector.broadcast %140 : vector<1x6x1xf32> to vector<1x6x6xf32>
    %142 = arith.subf %138, %141 : vector<1x6x6xf32>
    %143 = math.exp %142 : vector<1x6x6xf32>
    %cst_50 = arith.constant dense<0.000000e+00> : vector<1x6xf32>
    %144 = vector.multi_reduction <add>, %143, %cst_50 [2] : vector<1x6x6xf32> to vector<1x6xf32>
    %145 = vector.shape_cast %144 : vector<1x6xf32> to vector<1x6x1xf32>
    %146 = vector.broadcast %145 : vector<1x6x1xf32> to vector<1x6x6xf32>
    %147 = arith.divf %143, %146 : vector<1x6x6xf32>
    %148 = arith.truncf %147 : vector<1x6x6xf32> to vector<1x6x6xbf16>
    "tpu.trace_start"() <{level = 10 : i32, message = "bqk,bkd->bqd"}> : () -> ()
    %cst_51 = arith.constant dense<0.000000e+00> : vector<1x6x8xf32>
    %149 = tpu.matmul %148, %137, %cst_51 {dimension_numbers = #tpu.dot_dimension_numbers<[2], [1], [1], [2], [0, 0, 0, 1, 1, 2], [0], [0]>} : vector<1x6x6xbf16>, vector<1x6x8xbf16>, vector<1x6x8xf32> -> vector<1x6x8xf32>
    "tpu.trace_stop"() : () -> ()
    %150 = tpu.concatenate %95, %113, %131, %149 in 2 : vector<1x6x8xf32>, vector<1x6x8xf32>, vector<1x6x8xf32>, vector<1x6x8xf32> -> vector<1x6x32xf32>
    %151 = vector.shape_cast %150 : vector<1x6x32xf32> to vector<6x32xf32>
    %152 = arith.truncf %151 : vector<6x32xf32> to vector<6x32xbf16>
    %c0_52 = arith.constant 0 : index
    %c0_53 = arith.constant 0 : index
    %c0_54 = arith.constant 0 : index
    %153 = vector.load %arg11[%c0_52, %c0_53, %c0_54] : memref<1x32x32xbf16, #tpu.memory_space<vmem>>, vector<1x32x32xbf16>
    %154 = vector.shape_cast %153 : vector<1x32x32xbf16> to vector<32x32xbf16>
    %cst_55 = arith.constant dense<0.000000e+00> : vector<6x32xf32>
    %155 = tpu.matmul %152, %154, %cst_55 {dimension_numbers = #tpu.dot_dimension_numbers<[1], [0], [0], [1], [0, 0, 1, 1], [], []>} : vector<6x32xbf16>, vector<32x32xbf16>, vector<6x32xf32> -> vector<6x32xf32>
    %156 = arith.addf %35, %155 : vector<6x32xf32>
    %c0_56 = arith.constant 0 : index
    %c0_57 = arith.constant 0 : index
    %c0_58 = arith.constant 0 : index
    %157 = vector.load %arg12[%c0_56, %c0_57, %c0_58] : memref<1x1x32xf32, #tpu.memory_space<vmem>>, vector<1x1x32xf32>
    %158 = vector.shape_cast %157 : vector<1x1x32xf32> to vector<1x32xf32>
    %159 = vector.broadcast %158 : vector<1x32xf32> to vector<6x32xf32>
    %160 = arith.addf %156, %159 : vector<6x32xf32>
    %c0_59 = arith.constant 0 : index
    %c0_60 = arith.constant 0 : index
    %c0_61 = arith.constant 0 : index
    %161 = vector.load %arg13[%c0_59, %c0_60, %c0_61] : memref<1x1x32xf32, #tpu.memory_space<vmem>>, vector<1x1x32xf32>
    %162 = vector.shape_cast %161 : vector<1x1x32xf32> to vector<1x32xf32>
    %c0_62 = arith.constant 0 : index
    %c0_63 = arith.constant 0 : index
    %c0_64 = arith.constant 0 : index
    %163 = vector.load %arg14[%c0_62, %c0_63, %c0_64] : memref<1x1x32xf32, #tpu.memory_space<vmem>>, vector<1x1x32xf32>
    %164 = vector.shape_cast %163 : vector<1x1x32xf32> to vector<1x32xf32>
    %cst_65 = arith.constant dense<0.000000e+00> : vector<6xf32>
    %165 = vector.multi_reduction <add>, %160, %cst_65 [1] : vector<6x32xf32> to vector<6xf32>
    %166 = vector.shape_cast %165 : vector<6xf32> to vector<6x1xf32>
    %cst_66 = arith.constant 3.200000e+01 : f32
    %167 = vector.broadcast %cst_66 : f32 to vector<6x1xf32>
    %168 = arith.divf %166, %167 : vector<6x1xf32>
    %169 = vector.broadcast %168 : vector<6x1xf32> to vector<6x32xf32>
    %170 = arith.subf %160, %169 : vector<6x32xf32>
    %171 = arith.mulf %170, %170 : vector<6x32xf32>
    %cst_67 = arith.constant dense<0.000000e+00> : vector<6xf32>
    %172 = vector.multi_reduction <add>, %171, %cst_67 [1] : vector<6x32xf32> to vector<6xf32>
    %173 = vector.shape_cast %172 : vector<6xf32> to vector<6x1xf32>
    %cst_68 = arith.constant 3.200000e+01 : f32
    %174 = vector.broadcast %cst_68 : f32 to vector<6x1xf32>
    %175 = arith.divf %173, %174 : vector<6x1xf32>
    %176 = vector.broadcast %168 : vector<6x1xf32> to vector<6x32xf32>
    %177 = arith.subf %160, %176 : vector<6x32xf32>
    %cst_69 = arith.constant 9.99999974E-6 : f32
    %178 = vector.broadcast %cst_69 : f32 to vector<6x1xf32>
    %179 = arith.addf %175, %178 : vector<6x1xf32>
    %180 = math.rsqrt %179 : vector<6x1xf32>
    %181 = vector.broadcast %180 : vector<6x1xf32> to vector<6x32xf32>
    %182 = arith.mulf %177, %181 : vector<6x32xf32>
    %183 = vector.broadcast %162 : vector<1x32xf32> to vector<6x32xf32>
    %184 = arith.mulf %182, %183 : vector<6x32xf32>
    %185 = vector.broadcast %164 : vector<1x32xf32> to vector<6x32xf32>
    %186 = arith.addf %184, %185 : vector<6x32xf32>
    %187 = arith.truncf %186 : vector<6x32xf32> to vector<6x32xbf16>
    %c0_70 = arith.constant 0 : index
    %c0_71 = arith.constant 0 : index
    %c0_72 = arith.constant 0 : index
    %188 = vector.load %arg15[%c0_70, %c0_71, %c0_72] : memref<1x32x128xbf16, #tpu.memory_space<vmem>>, vector<1x32x128xbf16>
    %189 = vector.shape_cast %188 : vector<1x32x128xbf16> to vector<32x128xbf16>
    %cst_73 = arith.constant dense<0.000000e+00> : vector<6x128xf32>
    %190 = tpu.matmul %187, %189, %cst_73 {dimension_numbers = #tpu.dot_dimension_numbers<[1], [0], [0], [1], [0, 0, 1, 1], [], []>} : vector<6x32xbf16>, vector<32x128xbf16>, vector<6x128xf32> -> vector<6x128xf32>
    %c0_74 = arith.constant 0 : index
    %c0_75 = arith.constant 0 : index
    %c0_76 = arith.constant 0 : index
    %191 = vector.load %arg16[%c0_74, %c0_75, %c0_76] : memref<1x1x128xf32, #tpu.memory_space<vmem>>, vector<1x1x128xf32>
    %192 = vector.shape_cast %191 : vector<1x1x128xf32> to vector<1x128xf32>
    %193 = vector.broadcast %192 : vector<1x128xf32> to vector<6x128xf32>
    %194 = arith.addf %190, %193 : vector<6x128xf32>
    %cst_77 = arith.constant 1.702000e+00 : f32
    %195 = vector.broadcast %cst_77 : f32 to vector<6x128xf32>
    %196 = arith.mulf %195, %194 : vector<6x128xf32>
    %197 = arith.negf %196 : vector<6x128xf32>
    %198 = math.exp %197 : vector<6x128xf32>
    %cst_78 = arith.constant 1.000000e+00 : f32
    %199 = vector.broadcast %cst_78 : f32 to vector<6x128xf32>
    %200 = arith.addf %199, %198 : vector<6x128xf32>
    %201 = arith.divf %199, %200 : vector<6x128xf32>
    %202 = arith.mulf %194, %201 : vector<6x128xf32>
    %203 = arith.truncf %202 : vector<6x128xf32> to vector<6x128xbf16>
    %c0_79 = arith.constant 0 : index
    %c0_80 = arith.constant 0 : index
    %c0_81 = arith.constant 0 : index
    %204 = vector.load %arg17[%c0_79, %c0_80, %c0_81] : memref<1x128x32xbf16, #tpu.memory_space<vmem>>, vector<1x128x32xbf16>
    %205 = vector.shape_cast %204 : vector<1x128x32xbf16> to vector<128x32xbf16>
    %cst_82 = arith.constant dense<0.000000e+00> : vector<6x32xf32>
    %206 = tpu.matmul %203, %205, %cst_82 {dimension_numbers = #tpu.dot_dimension_numbers<[1], [0], [0], [1], [0, 0, 1, 1], [], []>} : vector<6x128xbf16>, vector<128x32xbf16>, vector<6x32xf32> -> vector<6x32xf32>
    %207 = arith.addf %160, %206 : vector<6x32xf32>
    %c0_83 = arith.constant 0 : index
    %c0_84 = arith.constant 0 : index
    %c0_85 = arith.constant 0 : index
    %208 = vector.load %arg18[%c0_83, %c0_84, %c0_85] : memref<1x1x32xf32, #tpu.memory_space<vmem>>, vector<1x1x32xf32>
    %209 = vector.shape_cast %208 : vector<1x1x32xf32> to vector<1x32xf32>
    %210 = vector.broadcast %209 : vector<1x32xf32> to vector<6x32xf32>
    %211 = arith.addf %207, %210 : vector<6x32xf32>
    %212 = vector.shape_cast %211 : vector<6x32xf32> to vector<1x6x32xf32>
    %213 = vector.extract_strided_slice %212 {offsets = [0, 0, 0], sizes = [1, 2, 32], strides = [1, 1, 1]} : vector<1x6x32xf32> to vector<1x2x32xf32>
    %214 = vector.shape_cast %213 : vector<1x2x32xf32> to vector<2x32xf32>
    %c0_86 = arith.constant 0 : index
    %c0_87 = arith.constant 0 : index
    %215 = vector.load %arg19[%c0_86, %c0_87] : memref<1x32xf32, #tpu.memory_space<vmem>>, vector<1x32xf32>
    %c0_88 = arith.constant 0 : index
    %c0_89 = arith.constant 0 : index
    %216 = vector.load %arg20[%c0_88, %c0_89] : memref<1x32xf32, #tpu.memory_space<vmem>>, vector<1x32xf32>
    %cst_90 = arith.constant dense<0.000000e+00> : vector<2xf32>
    %217 = vector.multi_reduction <add>, %214, %cst_90 [1] : vector<2x32xf32> to vector<2xf32>
    %218 = vector.shape_cast %217 : vector<2xf32> to vector<2x1xf32>
    %cst_91 = arith.constant 3.200000e+01 : f32
    %219 = vector.broadcast %cst_91 : f32 to vector<2x1xf32>
    %220 = arith.divf %218, %219 : vector<2x1xf32>
    %221 = vector.broadcast %220 : vector<2x1xf32> to vector<2x32xf32>
    %222 = arith.subf %214, %221 : vector<2x32xf32>
    %223 = arith.mulf %222, %222 : vector<2x32xf32>
    %cst_92 = arith.constant dense<0.000000e+00> : vector<2xf32>
    %224 = vector.multi_reduction <add>, %223, %cst_92 [1] : vector<2x32xf32> to vector<2xf32>
    %225 = vector.shape_cast %224 : vector<2xf32> to vector<2x1xf32>
    %cst_93 = arith.constant 3.200000e+01 : f32
    %226 = vector.broadcast %cst_93 : f32 to vector<2x1xf32>
    %227 = arith.divf %225, %226 : vector<2x1xf32>
    %228 = vector.broadcast %220 : vector<2x1xf32> to vector<2x32xf32>
    %229 = arith.subf %214, %228 : vector<2x32xf32>
    %cst_94 = arith.constant 9.99999974E-6 : f32
    %230 = vector.broadcast %cst_94 : f32 to vector<2x1xf32>
    %231 = arith.addf %227, %230 : vector<2x1xf32>
    %232 = math.rsqrt %231 : vector<2x1xf32>
    %233 = vector.broadcast %232 : vector<2x1xf32> to vector<2x32xf32>
    %234 = arith.mulf %229, %233 : vector<2x32xf32>
    %235 = vector.broadcast %215 : vector<1x32xf32> to vector<2x32xf32>
    %236 = arith.mulf %234, %235 : vector<2x32xf32>
    %237 = vector.broadcast %216 : vector<1x32xf32> to vector<2x32xf32>
    %238 = arith.addf %236, %237 : vector<2x32xf32>
    %239 = arith.truncf %238 : vector<2x32xf32> to vector<2x32xbf16>
    %c0_95 = arith.constant 0 : index
    %c0_96 = arith.constant 0 : index
    %240 = vector.load %arg21[%c0_95, %c0_96] : memref<32x32xbf16, #tpu.memory_space<vmem>>, vector<32x32xbf16>
    %cst_97 = arith.constant dense<0.000000e+00> : vector<2x32xf32>
    %241 = tpu.matmul %239, %240, %cst_97 {dimension_numbers = #tpu.dot_dimension_numbers<[1], [0], [0], [1], [0, 0, 1, 1], [], []>} : vector<2x32xbf16>, vector<32x32xbf16>, vector<2x32xf32> -> vector<2x32xf32>
    %242 = vector.shape_cast %241 : vector<2x32xf32> to vector<1x2x32xf32>
    %c0_98 = arith.constant 0 : index
    %c0_99 = arith.constant 0 : index
    %c0_100 = arith.constant 0 : index
    %243 = vector.load %arg22[%c0_98, %c0_99, %c0_100] : memref<1x2x32xf32, #tpu.memory_space<vmem>>, vector<1x2x32xf32>
    tpu.vector_store %arg22[%c0_98, %c0_99, %c0_100], %242 {strides = array<i32>} : memref<1x2x32xf32, #tpu.memory_space<vmem>>, vector<1x2x32xf32>,
    return
  }
  func.func @transform_0(%arg0: i32) -> (i32, i32, i32) {
    %c0_i32 = arith.constant 0 : i32
    %c0_i32_0 = arith.constant 0 : i32
    %c0_i32_1 = arith.constant 0 : i32
    return %arg0, %c0_i32, %c0_i32_0 : i32, i32, i32
  }
  func.func @transform_1(%arg0: i32) -> (i32, i32) {
    %c0_i32 = arith.constant 0 : i32
    %c0_i32_0 = arith.constant 0 : i32
    %c0_i32_1 = arith.constant 0 : i32
    return %c0_i32, %c0_i32_0 : i32, i32
  }
  func.func @transform_2(%arg0: i32) -> (i32, i32) {
    %c0_i32 = arith.constant 0 : i32
    %c0_i32_0 = arith.constant 0 : i32
    %c0_i32_1 = arith.constant 0 : i32
    return %c0_i32, %c0_i32_0 : i32, i32
  }
  func.func @transform_3(%arg0: i32) -> (i32, i32) {
    %c0_i32 = arith.constant 0 : i32
    %c0_i32_0 = arith.constant 0 : i32
    %c0_i32_1 = arith.constant 0 : i32
    return %c0_i32, %c0_i32_0 : i32, i32
  }
  func.func @transform_4(%arg0: i32) -> (i32, i32) {
    %c0_i32 = arith.constant 0 : i32
    %c0_i32_0 = arith.constant 0 : i32
    %c0_i32_1 = arith.constant 0 : i32
    return %c0_i32, %c0_i32_0 : i32, i32
  }
  func.func @transform_5(%arg0: i32) -> (i32, i32) {
    %c0_i32 = arith.constant 0 : i32
    %c0_i32_0 = arith.constant 0 : i32
    %c0_i32_1 = arith.constant 0 : i32
    return %c0_i32, %c0_i32_0 : i32, i32
  }
  func.func @transform_6(%arg0: i32) -> (i32, i32, i32) {
    %c0_i32 = arith.constant 0 : i32
    %c0_i32_0 = arith.constant 0 : i32
    %c0_i32_1 = arith.constant 0 : i32
    %c0_i32_2 = arith.constant 0 : i32
    return %c0_i32, %c0_i32_0, %c0_i32_1 : i32, i32, i32
  }
  func.func @transform_7(%arg0: i32) -> (i32, i32, i32) {
    %c0_i32 = arith.constant 0 : i32
    %c0_i32_0 = arith.constant 0 : i32
    %c0_i32_1 = arith.constant 0 : i32
    %c0_i32_2 = arith.constant 0 : i32
    return %c0_i32, %c0_i32_0, %c0_i32_1 : i32, i32, i32
  }
  func.func @transform_8(%arg0: i32) -> (i32, i32, i32) {
    %c0_i32 = arith.constant 0 : i32
    %c0_i32_0 = arith.constant 0 : i32
    %c0_i32_1 = arith.constant 0 : i32
    %c0_i32_2 = arith.constant 0 : i32
    return %c0_i32, %c0_i32_0, %c0_i32_1 : i32, i32, i32
  }
  func.func @transform_9(%arg0: i32) -> (i32, i32, i32) {
    %c0_i32 = arith.constant 0 : i32
    %c0_i32_0 = arith.constant 0 : i32
    %c0_i32_1 = arith.constant 0 : i32
    %c0_i32_2 = arith.constant 0 : i32
    return %c0_i32, %c0_i32_0, %c0_i32_1 : i32, i32, i32
  }
  func.func @transform_10(%arg0: i32) -> (i32, i32, i32) {
    %c0_i32 = arith.constant 0 : i32
    %c0_i32_0 = arith.constant 0 : i32
    %c0_i32_1 = arith.constant 0 : i32
    %c0_i32_2 = arith.constant 0 : i32
    return %c0_i32, %c0_i32_0, %c0_i32_1 : i32, i32, i32
  }
  func.func @transform_11(%arg0: i32) -> (i32, i32, i32) {
    %c0_i32 = arith.constant 0 : i32
    %c0_i32_0 = arith.constant 0 : i32
    %c0_i32_1 = arith.constant 0 : i32
    %c0_i32_2 = arith.constant 0 : i32
    return %c0_i32, %c0_i32_0, %c0_i32_1 : i32, i32, i32
  }
  func.func @transform_12(%arg0: i32) -> (i32, i32, i32) {
    %c0_i32 = arith.constant 0 : i32
    %c0_i32_0 = arith.constant 0 : i32
    %c0_i32_1 = arith.constant 0 : i32
    %c0_i32_2 = arith.constant 0 : i32
    return %c0_i32, %c0_i32_0, %c0_i32_1 : i32, i32, i32
  }
  func.func @transform_13(%arg0: i32) -> (i32, i32, i32) {
    %c0_i32 = arith.constant 0 : i32
    %c0_i32_0 = arith.constant 0 : i32
    %c0_i32_1 = arith.constant 0 : i32
    %c0_i32_2 = arith.constant 0 : i32
    return %c0_i32, %c0_i32_0, %c0_i32_1 : i32, i32, i32
  }
  func.func @transform_14(%arg0: i32) -> (i32, i32, i32) {
    %c0_i32 = arith.constant 0 : i32
    %c0_i32_0 = arith.constant 0 : i32
    %c0_i32_1 = arith.constant 0 : i32
    %c0_i32_2 = arith.constant 0 : i32
    return %c0_i32, %c0_i32_0, %c0_i32_1 : i32, i32, i32
  }
  func.func @transform_15(%arg0: i32) -> (i32, i32, i32) {
    %c0_i32 = arith.constant 0 : i32
    %c0_i32_0 = arith.constant 0 : i32
    %c0_i32_1 = arith.constant 0 : i32
    %c0_i32_2 = arith.constant 0 : i32
    return %c0_i32, %c0_i32_0, %c0_i32_1 : i32, i32, i32
  }
  func.func @transform_16(%arg0: i32) -> (i32, i32, i32) {
    %c0_i32 = arith.constant 0 : i32
    %c0_i32_0 = arith.constant 0 : i32
    %c0_i32_1 = arith.constant 0 : i32
    %c0_i32_2 = arith.constant 0 : i32
    return %c0_i32, %c0_i32_0, %c0_i32_1 : i32, i32, i32
  }
  func.func @transform_17(%arg0: i32) -> (i32, i32, i32) {
    %c0_i32 = arith.constant 0 : i32
    %c0_i32_0 = arith.constant 0 : i32
    %c0_i32_1 = arith.constant 0 : i32
    %c0_i32_2 = arith.constant 0 : i32
    return %c0_i32, %c0_i32_0, %c0_i32_1 : i32, i32, i32
  }
  func.func @transform_18(%arg0: i32) -> (i32, i32) {
    %c0_i32 = arith.constant 0 : i32
    %c0_i32_0 = arith.constant 0 : i32
    %c0_i32_1 = arith.constant 0 : i32
    return %c0_i32, %c0_i32_0 : i32, i32
  }
  func.func @transform_19(%arg0: i32) -> (i32, i32) {
    %c0_i32 = arith.constant 0 : i32
    %c0_i32_0 = arith.constant 0 : i32
    %c0_i32_1 = arith.constant 0 : i32
    return %c0_i32, %c0_i32_0 : i32, i32
  }
  func.func @transform_20(%arg0: i32) -> (i32, i32) {
    %c0_i32 = arith.constant 0 : i32
    %c0_i32_0 = arith.constant 0 : i32
    %c0_i32_1 = arith.constant 0 : i32
    return %c0_i32, %c0_i32_0 : i32, i32
  }
  func.func @transform_21(%arg0: i32) -> (i32, i32, i32) {
    %c0_i32 = arith.constant 0 : i32
    %c0_i32_0 = arith.constant 0 : i32
    %c0_i32_1 = arith.constant 0 : i32
    return %arg0, %c0_i32, %c0_i32_0 : i32, i32, i32
  }
}

</mosaic_0001>

<llo_original>
// kernel: visual_generator_forward.1
$region0: #{visual_generator_forward.1}
  #allocation0 [shape = 'u32[]', space=smem, size = 0x4, offset = 0x4, fixed_abs, tag = 'smem constant byte address 0x4 - core index']
  #allocation1 [shape = 'u32[72,128]{1,0:T(1,128)}', space=vmem, size = 0x9000, scoped, tag = 'internal scratch']
  %s0 = inlined_call_operand.vmem [shape: bf16[2,4,192], index: 0, kind: input, shape index: {}]
  %s1 = inlined_call_operand.vmem [shape: f32[2,32], index: 1, kind: input, shape index: {}]
  %s2 = inlined_call_operand.vmem [shape: bf16[192,32], index: 2, kind: input, shape index: {}]
  %s3 = inlined_call_operand.vmem [shape: f32[4,32], index: 3, kind: input, shape index: {}]
  %s4 = inlined_call_operand.vmem [shape: f32[1,32], index: 4, kind: input, shape index: {}]
  %s5 = inlined_call_operand.vmem [shape: f32[1,32], index: 5, kind: input, shape index: {}]
  %s6 = inlined_call_operand.vmem [shape: f32[1,1,32], index: 6, kind: input, shape index: {}]
  %s7 = inlined_call_operand.vmem [shape: f32[1,1,32], index: 7, kind: input, shape index: {}]
  %s8 = inlined_call_operand.vmem [shape: bf16[1,32,96], index: 8, kind: input, shape index: {}]
  %s9 = inlined_call_operand.vmem [shape: f32[1,1,96], index: 9, kind: input, shape index: {}]
  %s10 = inlined_call_operand.vmem [shape: bf16[1,32,32], index: 10, kind: input, shape index: {}]
  %s11 = inlined_call_operand.vmem [shape: f32[1,1,32], index: 11, kind: input, shape index: {}]
  %s12 = inlined_call_operand.vmem [shape: f32[1,1,32], index: 12, kind: input, shape index: {}]
  %s13 = inlined_call_operand.vmem [shape: f32[1,1,32], index: 13, kind: input, shape index: {}]
  %s14 = inlined_call_operand.vmem [shape: bf16[1,32,128], index: 14, kind: input, shape index: {}]
  %s15 = inlined_call_operand.vmem [shape: f32[1,1,128], index: 15, kind: input, shape index: {}]
  %s16 = inlined_call_operand.vmem [shape: bf16[1,128,32], index: 16, kind: input, shape index: {}]
  %s17 = inlined_call_operand.vmem [shape: f32[1,1,32], index: 17, kind: input, shape index: {}]
  %s18 = inlined_call_operand.vmem [shape: f32[1,32], index: 18, kind: input, shape index: {}]
  %s19 = inlined_call_operand.vmem [shape: f32[1,32], index: 19, kind: input, shape index: {}]
  %s20 = inlined_call_operand.vmem [shape: bf16[32,32], index: 20, kind: input, shape index: {}]
  %s21 = inlined_call_operand.hbm [shape: f32[2,2,32], index: 21, kind: output, shape index: {}]
  %s22 = sld [smem:[#allocation0]]
  $region117: #{visual_generator_forward.1} parent=0
    _
  %s24 = ssub.s32 1, %s22
  %s25 = scalar_select 0, %s24, %s22
  $region1: #{visual_generator_forward.1} parent=0
    #allocation2 [shape = 'u8[2048]{0}', space=vmem, size = 0x800, scoped, tag = 'output window, operand 0']
    #allocation3 [shape = 's32[2]{0}', space=sflag, size = 0x8, scoped, tag = 'scoped memory for visual_generator_forward.1']
    %26 = vsyncpa [#allocation3], 0
    %s27 = scalar_lea.sflag [#allocation3], 1
    %28 = vsyncpa %s27, 0
    loop: start=0, step=1, limit=4
    $region2: #{visual_generator_forward.1} parent=1 // loop_pre_header
      _
    $region3: #{visual_generator_forward.1} parent=1 // loop_header
      %s30 = sphi 0, %s34
      %p31 = scmp.ge.s32.totalorder %s30, 4
      %s40 = sphi 0, %s42
      %s43 = sphi 0, %s40
      %s44 = sphi 0, %s43
      %s60 = sphi 0, %s44
      %s64 = sphi 0, %s64
      %s66 = sphi 0, %s64
      %s67 = sphi 0, %s66
      %s81 = sphi 0, %s67
      %s85 = sphi 0, %s85
      %s87 = sphi 0, %s85
      %s88 = sphi 0, %s87
      %s102 = sphi 0, %s88
      %s106 = sphi 0, %s106
      %s108 = sphi 0, %s106
      %s109 = sphi 0, %s108
      %s123 = sphi 0, %s109
      %s127 = sphi 0, %s127
      %s129 = sphi 0, %s127
      %s130 = sphi 0, %s129
      %s144 = sphi 0, %s130
      %s148 = sphi 0, %s148
      %s150 = sphi 0, %s148
      %s151 = sphi 0, %s150
      %s165 = sphi 0, %s151
      %s169 = sphi 0, %s169
      %s171 = sphi 0, %s169
      %s172 = sphi 0, %s171
      %s186 = sphi 0, %s172
      %s190 = sphi 0, %s190
      %s192 = sphi 0, %s190
      %s193 = sphi 0, %s192
      %s207 = sphi 0, %s193
      %s211 = sphi 0, %s211
      %s213 = sphi 0, %s211
      %s214 = sphi 0, %s213
      %s228 = sphi 0, %s214
      %s232 = sphi 0, %s232
      %s234 = sphi 0, %s232
      %s235 = sphi 0, %s234
      %s249 = sphi 0, %s235
      %s253 = sphi 0, %s253
      %s255 = sphi 0, %s253
      %s256 = sphi 0, %s255
      %s270 = sphi 0, %s256
      %s274 = sphi 0, %s274
      %s276 = sphi 0, %s274
      %s277 = sphi 0, %s276
      %s291 = sphi 0, %s277
      %s295 = sphi 0, %s295
      %s297 = sphi 0, %s295
      %s298 = sphi 0, %s297
      %s312 = sphi 0, %s298
      %s316 = sphi 0, %s316
      %s318 = sphi 0, %s316
      %s319 = sphi 0, %s318
      %s333 = sphi 0, %s319
      %s337 = sphi 0, %s337
      %s339 = sphi 0, %s337
      %s340 = sphi 0, %s339
      %s354 = sphi 0, %s340
      %s358 = sphi 0, %s358
      %s360 = sphi 0, %s358
      %s361 = sphi 0, %s360
      %s375 = sphi 0, %s361
      %s379 = sphi 0, %s379
      %s381 = sphi 0, %s379
      %s382 = sphi 0, %s381
      %s396 = sphi 0, %s382
      %s400 = sphi 0, %s400
      %s402 = sphi 0, %s400
      %s403 = sphi 0, %s402
      %s417 = sphi 0, %s403
      %s421 = sphi 0, %s421
      %s423 = sphi 0, %s421
      %s424 = sphi 0, %s423
      %s438 = sphi 0, %s424
      %s442 = sphi 0, %s442
      %s444 = sphi 0, %s442
      %s445 = sphi 0, %s444
      %s459 = sphi 0, %s445
      %s463 = sphi 0, %s463
      %s465 = sphi 0, %s463
      %s466 = sphi 0, %s465
      %s480 = sphi 0, %s466
      %s486 = sphi 0, %s488
      %s489 = sphi 0, %s486
      %s490 = sphi 0, %s489
      %s506 = sphi 0, %s490
    $region4: #{visual_generator_forward.1} parent=1 // loop_header_branch
      %33 = sbr.rel (%p31) target = $region8
    $region5: #{visual_generator_forward.1} parent=1 // loop_body
      %s35 = ssub.s32 %s30, 1
      %s36 = ssub.s32 %s30, 2
      %s37 = sadd.s32 %s30, 1
      %s38 = ssub.s32 %s30, %s37
      %p39 = scmp.eq.s32.totalorder %s38, 0
      %s41 = sadd.s32 %s40, 1
      %s42 = scalar_select %p39, %s40, %s41
      %p45 = pneg %p39
      %p46 = scmp.eq.s32.totalorder %s30, 1
      %p47 = por %p45, %p46
      %p48 = scmp.ne.s32.totalorder %s40, %s43
      %p49 = scmp.eq.s32.totalorder %s30, 0
      %p50 = por %p48, %p49
      %p51 = scmp.ne.s32.totalorder %s40, %s43
      %p52 = scmp.eq.s32.totalorder %s35, 1
      %p53 = por %p51, %p52
      %p54 = scmp.ne.s32.totalorder %s43, %s44
      %p55 = scmp.eq.s32.totalorder %s35, 0
      %p56 = por %p54, %p55
      %p57 = scmp.ne.s32.totalorder %s43, %s44
      %p58 = scmp.eq.s32.totalorder %s36, 1
      %p59 = por %p57, %p58
      %p61 = scmp.ne.s32.totalorder %s44, %s60
      %p62 = scmp.eq.s32.totalorder %s36, 0
      %p63 = por %p61, %p62
      %s65 = sadd.s32 %s64, 1
      %p68 = scmp.eq.s32.totalorder %s30, 1
      %p69 = scmp.ne.s32.totalorder %s64, %s66
      %p70 = scmp.eq.s32.totalorder %s30, 0
      %p71 = por %p69, %p70
      %p72 = scmp.ne.s32.totalorder %s64, %s66
      %p73 = scmp.eq.s32.totalorder %s35, 1
      %p74 = por %p72, %p73
      %p75 = scmp.ne.s32.totalorder %s66, %s67
      %p76 = scmp.eq.s32.totalorder %s35, 0
      %p77 = por %p75, %p76
      %p78 = scmp.ne.s32.totalorder %s66, %s67
      %p79 = scmp.eq.s32.totalorder %s36, 1
      %p80 = por %p78, %p79
      %p82 = scmp.ne.s32.totalorder %s67, %s81
      %p83 = scmp.eq.s32.totalorder %s36, 0
      %p84 = por %p82, %p83
      %s86 = sadd.s32 %s85, 1
      %p89 = scmp.eq.s32.totalorder %s30, 1
      %p90 = scmp.ne.s32.totalorder %s85, %s87
      %p91 = scmp.eq.s32.totalorder %s30, 0
      %p92 = por %p90, %p91
      %p93 = scmp.ne.s32.totalorder %s85, %s87
      %p94 = scmp.eq.s32.totalorder %s35, 1
      %p95 = por %p93, %p94
      %p96 = scmp.ne.s32.totalorder %s87, %s88
      %p97 = scmp.eq.s32.totalorder %s35, 0
      %p98 = por %p96, %p97
      %p99 = scmp.ne.s32.totalorder %s87, %s88
      %p100 = scmp.eq.s32.totalorder %s36, 1
      %p101 = por %p99, %p100
      %p103 = scmp.ne.s32.totalorder %s88, %s102
      %p104 = scmp.eq.s32.totalorder %s36, 0
      %p105 = por %p103, %p104
      %s107 = sadd.s32 %s106, 1
      %p110 = scmp.eq.s32.totalorder %s30, 1
      %p111 = scmp.ne.s32.totalorder %s106, %s108
      %p112 = scmp.eq.s32.totalorder %s30, 0
      %p113 = por %p111, %p112
      %p114 = scmp.ne.s32.totalorder %s106, %s108
      %p115 = scmp.eq.s32.totalorder %s35, 1
      %p116 = por %p114, %p115
      %p117 = scmp.ne.s32.totalorder %s108, %s109
      %p118 = scmp.eq.s32.totalorder %s35, 0
      %p119 = por %p117, %p118
      %p120 = scmp.ne.s32.totalorder %s108, %s109
      %p121 = scmp.eq.s32.totalorder %s36, 1
      %p122 = por %p120, %p121
      %p124 = scmp.ne.s32.totalorder %s109, %s123
      %p125 = scmp.eq.s32.totalorder %s36, 0
      %p126 = por %p124, %p125
      %s128 = sadd.s32 %s127, 1
      %p131 = scmp.eq.s32.totalorder %s30, 1
      %p132 = scmp.ne.s32.totalorder %s127, %s129
      %p133 = scmp.eq.s32.totalorder %s30, 0
      %p134 = por %p132, %p133
      %p135 = scmp.ne.s32.totalorder %s127, %s129
      %p136 = scmp.eq.s32.totalorder %s35, 1
      %p137 = por %p135, %p136
      %p138 = scmp.ne.s32.totalorder %s129, %s130
      %p139 = scmp.eq.s32.totalorder %s35, 0
      %p140 = por %p138, %p139
      %p141 = scmp.ne.s32.totalorder %s129, %s130
      %p142 = scmp.eq.s32.totalorder %s36, 1
      %p143 = por %p141, %p142
      %p145 = scmp.ne.s32.totalorder %s130, %s144
      %p146 = scmp.eq.s32.totalorder %s36, 0
      %p147 = por %p145, %p146
      %s149 = sadd.s32 %s148, 1
      %p152 = scmp.eq.s32.totalorder %s30, 1
      %p153 = scmp.ne.s32.totalorder %s148, %s150
      %p154 = scmp.eq.s32.totalorder %s30, 0
      %p155 = por %p153, %p154
      %p156 = scmp.ne.s32.totalorder %s148, %s150
      %p157 = scmp.eq.s32.totalorder %s35, 1
      %p158 = por %p156, %p157
      %p159 = scmp.ne.s32.totalorder %s150, %s151
      %p160 = scmp.eq.s32.totalorder %s35, 0
      %p161 = por %p159, %p160
      %p162 = scmp.ne.s32.totalorder %s150, %s151
      %p163 = scmp.eq.s32.totalorder %s36, 1
      %p164 = por %p162, %p163
      %p166 = scmp.ne.s32.totalorder %s151, %s165
      %p167 = scmp.eq.s32.totalorder %s36, 0
      %p168 = por %p166, %p167
      %s170 = sadd.s32 %s169, 1
      %p173 = scmp.eq.s32.totalorder %s30, 1
      %p174 = scmp.ne.s32.totalorder %s169, %s171
      %p175 = scmp.eq.s32.totalorder %s30, 0
      %p176 = por %p174, %p175
      %p177 = scmp.ne.s32.totalorder %s169, %s171
      %p178 = scmp.eq.s32.totalorder %s35, 1
      %p179 = por %p177, %p178
      %p180 = scmp.ne.s32.totalorder %s171, %s172
      %p181 = scmp.eq.s32.totalorder %s35, 0
      %p182 = por %p180, %p181
      %p183 = scmp.ne.s32.totalorder %s171, %s172
      %p184 = scmp.eq.s32.totalorder %s36, 1
      %p185 = por %p183, %p184
      %p187 = scmp.ne.s32.totalorder %s172, %s186
      %p188 = scmp.eq.s32.totalorder %s36, 0
      %p189 = por %p187, %p188
      %s191 = sadd.s32 %s190, 1
      %p194 = scmp.eq.s32.totalorder %s30, 1
      %p195 = scmp.ne.s32.totalorder %s190, %s192
      %p196 = scmp.eq.s32.totalorder %s30, 0
      %p197 = por %p195, %p196
      %p198 = scmp.ne.s32.totalorder %s190, %s192
      %p199 = scmp.eq.s32.totalorder %s35, 1
      %p200 = por %p198, %p199
      %p201 = scmp.ne.s32.totalorder %s192, %s193
      %p202 = scmp.eq.s32.totalorder %s35, 0
      %p203 = por %p201, %p202
      %p204 = scmp.ne.s32.totalorder %s192, %s193
      %p205 = scmp.eq.s32.totalorder %s36, 1
      %p206 = por %p204, %p205
      %p208 = scmp.ne.s32.totalorder %s193, %s207
      %p209 = scmp.eq.s32.totalorder %s36, 0
      %p210 = por %p208, %p209
      %s212 = sadd.s32 %s211, 1
      %p215 = scmp.eq.s32.totalorder %s30, 1
      %p216 = scmp.ne.s32.totalorder %s211, %s213
      %p217 = scmp.eq.s32.totalorder %s30, 0
      %p218 = por %p216, %p217
      %p219 = scmp.ne.s32.totalorder %s211, %s213
      %p220 = scmp.eq.s32.totalorder %s35, 1
      %p221 = por %p219, %p220
      %p222 = scmp.ne.s32.totalorder %s213, %s214
      %p223 = scmp.eq.s32.totalorder %s35, 0
      %p224 = por %p222, %p223
      %p225 = scmp.ne.s32.totalorder %s213, %s214
      %p226 = scmp.eq.s32.totalorder %s36, 1
      %p227 = por %p225, %p226
      %p229 = scmp.ne.s32.totalorder %s214, %s228
      %p230 = scmp.eq.s32.totalorder %s36, 0
      %p231 = por %p229, %p230
      %s233 = sadd.s32 %s232, 1
      %p236 = scmp.eq.s32.totalorder %s30, 1
      %p237 = scmp.ne.s32.totalorder %s232, %s234
      %p238 = scmp.eq.s32.totalorder %s30, 0
      %p239 = por %p237, %p238
      %p240 = scmp.ne.s32.totalorder %s232, %s234
      %p241 = scmp.eq.s32.totalorder %s35, 1
      %p242 = por %p240, %p241
      %p243 = scmp.ne.s32.totalorder %s234, %s235
      %p244 = scmp.eq.s32.totalorder %s35, 0
      %p245 = por %p243, %p244
      %p246 = scmp.ne.s32.totalorder %s234, %s235
      %p247 = scmp.eq.s32.totalorder %s36, 1
      %p248 = por %p246, %p247
      %p250 = scmp.ne.s32.totalorder %s235, %s249
      %p251 = scmp.eq.s32.totalorder %s36, 0
      %p252 = por %p250, %p251
      %s254 = sadd.s32 %s253, 1
      %p257 = scmp.eq.s32.totalorder %s30, 1
      %p258 = scmp.ne.s32.totalorder %s253, %s255
      %p259 = scmp.eq.s32.totalorder %s30, 0
      %p260 = por %p258, %p259
      %p261 = scmp.ne.s32.totalorder %s253, %s255
      %p262 = scmp.eq.s32.totalorder %s35, 1
      %p263 = por %p261, %p262
      %p264 = scmp.ne.s32.totalorder %s255, %s256
      %p265 = scmp.eq.s32.totalorder %s35, 0
      %p266 = por %p264, %p265
      %p267 = scmp.ne.s32.totalorder %s255, %s256
      %p268 = scmp.eq.s32.totalorder %s36, 1
      %p269 = por %p267, %p268
      %p271 = scmp.ne.s32.totalorder %s256, %s270
      %p272 = scmp.eq.s32.totalorder %s36, 0
      %p273 = por %p271, %p272
      %s275 = sadd.s32 %s274, 1
      %p278 = scmp.eq.s32.totalorder %s30, 1
      %p279 = scmp.ne.s32.totalorder %s274, %s276
      %p280 = scmp.eq.s32.totalorder %s30, 0
      %p281 = por %p279, %p280
      %p282 = scmp.ne.s32.totalorder %s274, %s276
      %p283 = scmp.eq.s32.totalorder %s35, 1
      %p284 = por %p282, %p283
      %p285 = scmp.ne.s32.totalorder %s276, %s277
      %p286 = scmp.eq.s32.totalorder %s35, 0
      %p287 = por %p285, %p286
      %p288 = scmp.ne.s32.totalorder %s276, %s277
      %p289 = scmp.eq.s32.totalorder %s36, 1
      %p290 = por %p288, %p289
      %p292 = scmp.ne.s32.totalorder %s277, %s291
      %p293 = scmp.eq.s32.totalorder %s36, 0
      %p294 = por %p292, %p293
      %s296 = sadd.s32 %s295, 1
      %p299 = scmp.eq.s32.totalorder %s30, 1
      %p300 = scmp.ne.s32.totalorder %s295, %s297
      %p301 = scmp.eq.s32.totalorder %s30, 0
      %p302 = por %p300, %p301
      %p303 = scmp.ne.s32.totalorder %s295, %s297
      %p304 = scmp.eq.s32.totalorder %s35, 1
      %p305 = por %p303, %p304
      %p306 = scmp.ne.s32.totalorder %s297, %s298
      %p307 = scmp.eq.s32.totalorder %s35, 0
      %p308 = por %p306, %p307
      %p309 = scmp.ne.s32.totalorder %s297, %s298
      %p310 = scmp.eq.s32.totalorder %s36, 1
      %p311 = por %p309, %p310
      %p313 = scmp.ne.s32.totalorder %s298, %s312
      %p314 = scmp.eq.s32.totalorder %s36, 0
      %p315 = por %p313, %p314
      %s317 = sadd.s32 %s316, 1
      %p320 = scmp.eq.s32.totalorder %s30, 1
      %p321 = scmp.ne.s32.totalorder %s316, %s318
      %p322 = scmp.eq.s32.totalorder %s30, 0
      %p323 = por %p321, %p322
      %p324 = scmp.ne.s32.totalorder %s316, %s318
      %p325 = scmp.eq.s32.totalorder %s35, 1
      %p326 = por %p324, %p325
      %p327 = scmp.ne.s32.totalorder %s318, %s319
      %p328 = scmp.eq.s32.totalorder %s35, 0
      %p329 = por %p327, %p328
      %p330 = scmp.ne.s32.totalorder %s318, %s319
      %p331 = scmp.eq.s32.totalorder %s36, 1
      %p332 = por %p330, %p331
      %p334 = scmp.ne.s32.totalorder %s319, %s333
      %p335 = scmp.eq.s32.totalorder %s36, 0
      %p336 = por %p334, %p335
      %s338 = sadd.s32 %s337, 1
      %p341 = scmp.eq.s32.totalorder %s30, 1
      %p342 = scmp.ne.s32.totalorder %s337, %s339
      %p343 = scmp.eq.s32.totalorder %s30, 0
      %p344 = por %p342, %p343
      %p345 = scmp.ne.s32.totalorder %s337, %s339
      %p346 = scmp.eq.s32.totalorder %s35, 1
      %p347 = por %p345, %p346
      %p348 = scmp.ne.s32.totalorder %s339, %s340
      %p349 = scmp.eq.s32.totalorder %s35, 0
      %p350 = por %p348, %p349
      %p351 = scmp.ne.s32.totalorder %s339, %s340
      %p352 = scmp.eq.s32.totalorder %s36, 1
      %p353 = por %p351, %p352
      %p355 = scmp.ne.s32.totalorder %s340, %s354
      %p356 = scmp.eq.s32.totalorder %s36, 0
      %p357 = por %p355, %p356
      %s359 = sadd.s32 %s358, 1
      %p362 = scmp.eq.s32.totalorder %s30, 1
      %p363 = scmp.ne.s32.totalorder %s358, %s360
      %p364 = scmp.eq.s32.totalorder %s30, 0
      %p365 = por %p363, %p364
      %p366 = scmp.ne.s32.totalorder %s358, %s360
      %p367 = scmp.eq.s32.totalorder %s35, 1
      %p368 = por %p366, %p367
      %p369 = scmp.ne.s32.totalorder %s360, %s361
      %p370 = scmp.eq.s32.totalorder %s35, 0
      %p371 = por %p369, %p370
      %p372 = scmp.ne.s32.totalorder %s360, %s361
      %p373 = scmp.eq.s32.totalorder %s36, 1
      %p374 = por %p372, %p373
      %p376 = scmp.ne.s32.totalorder %s361, %s375
      %p377 = scmp.eq.s32.totalorder %s36, 0
      %p378 = por %p376, %p377
      %s380 = sadd.s32 %s379, 1
      %p383 = scmp.eq.s32.totalorder %s30, 1
      %p384 = scmp.ne.s32.totalorder %s379, %s381
      %p385 = scmp.eq.s32.totalorder %s30, 0
      %p386 = por %p384, %p385
      %p387 = scmp.ne.s32.totalorder %s379, %s381
      %p388 = scmp.eq.s32.totalorder %s35, 1
      %p389 = por %p387, %p388
      %p390 = scmp.ne.s32.totalorder %s381, %s382
      %p391 = scmp.eq.s32.totalorder %s35, 0
      %p392 = por %p390, %p391
      %p393 = scmp.ne.s32.totalorder %s381, %s382
      %p394 = scmp.eq.s32.totalorder %s36, 1
      %p395 = por %p393, %p394
      %p397 = scmp.ne.s32.totalorder %s382, %s396
      %p398 = scmp.eq.s32.totalorder %s36, 0
      %p399 = por %p397, %p398
      %s401 = sadd.s32 %s400, 1
      %p404 = scmp.eq.s32.totalorder %s30, 1
      %p405 = scmp.ne.s32.totalorder %s400, %s402
      %p406 = scmp.eq.s32.totalorder %s30, 0
      %p407 = por %p405, %p406
      %p408 = scmp.ne.s32.totalorder %s400, %s402
      %p409 = scmp.eq.s32.totalorder %s35, 1
      %p410 = por %p408, %p409
      %p411 = scmp.ne.s32.totalorder %s402, %s403
      %p412 = scmp.eq.s32.totalorder %s35, 0
      %p413 = por %p411, %p412
      %p414 = scmp.ne.s32.totalorder %s402, %s403
      %p415 = scmp.eq.s32.totalorder %s36, 1
      %p416 = por %p414, %p415
      %p418 = scmp.ne.s32.totalorder %s403, %s417
      %p419 = scmp.eq.s32.totalorder %s36, 0
      %p420 = por %p418, %p419
      %s422 = sadd.s32 %s421, 1
      %p425 = scmp.eq.s32.totalorder %s30, 1
      %p426 = scmp.ne.s32.totalorder %s421, %s423
      %p427 = scmp.eq.s32.totalorder %s30, 0
      %p428 = por %p426, %p427
      %p429 = scmp.ne.s32.totalorder %s421, %s423
      %p430 = scmp.eq.s32.totalorder %s35, 1
      %p431 = por %p429, %p430
      %p432 = scmp.ne.s32.totalorder %s423, %s424
      %p433 = scmp.eq.s32.totalorder %s35, 0
      %p434 = por %p432, %p433
      %p435 = scmp.ne.s32.totalorder %s423, %s424
      %p436 = scmp.eq.s32.totalorder %s36, 1
      %p437 = por %p435, %p436
      %p439 = scmp.ne.s32.totalorder %s424, %s438
      %p440 = scmp.eq.s32.totalorder %s36, 0
      %p441 = por %p439, %p440
      %s443 = sadd.s32 %s442, 1
      %p446 = scmp.eq.s32.totalorder %s30, 1
      %p447 = scmp.ne.s32.totalorder %s442, %s444
      %p448 = scmp.eq.s32.totalorder %s30, 0
      %p449 = por %p447, %p448
      %p450 = scmp.ne.s32.totalorder %s442, %s444
      %p451 = scmp.eq.s32.totalorder %s35, 1
      %p452 = por %p450, %p451
      %p453 = scmp.ne.s32.totalorder %s444, %s445
      %p454 = scmp.eq.s32.totalorder %s35, 0
      %p455 = por %p453, %p454
      %p456 = scmp.ne.s32.totalorder %s444, %s445
      %p457 = scmp.eq.s32.totalorder %s36, 1
      %p458 = por %p456, %p457
      %p460 = scmp.ne.s32.totalorder %s445, %s459
      %p461 = scmp.eq.s32.totalorder %s36, 0
      %p462 = por %p460, %p461
      %s464 = sadd.s32 %s463, 1
      %p467 = scmp.eq.s32.totalorder %s30, 1
      %p468 = scmp.ne.s32.totalorder %s463, %s465
      %p469 = scmp.eq.s32.totalorder %s30, 0
      %p470 = por %p468, %p469
      %p471 = scmp.ne.s32.totalorder %s463, %s465
      %p472 = scmp.eq.s32.totalorder %s35, 1
      %p473 = por %p471, %p472
      %p474 = scmp.ne.s32.totalorder %s465, %s466
      %p475 = scmp.eq.s32.totalorder %s35, 0
      %p476 = por %p474, %p475
      %p477 = scmp.ne.s32.totalorder %s465, %s466
      %p478 = scmp.eq.s32.totalorder %s36, 1
      %p479 = por %p477, %p478
      %p481 = scmp.ne.s32.totalorder %s466, %s480
      %p482 = scmp.eq.s32.totalorder %s36, 0
      %p483 = por %p481, %p482
      %s484 = ssub.s32 %s30, %s37
      %p485 = scmp.eq.s32.totalorder %s484, 0
      %s487 = sadd.s32 %s486, 1
      %s488 = scalar_select %p485, %s486, %s487
      %p491 = pneg %p485
      %p492 = scmp.eq.s32.totalorder %s30, 1
      %p493 = por %p491, %p492
      %p494 = scmp.ne.s32.totalorder %s486, %s489
      %p495 = scmp.eq.s32.totalorder %s30, 0
      %p496 = por %p494, %p495
      %p497 = scmp.ne.s32.totalorder %s486, %s489
      %p498 = scmp.eq.s32.totalorder %s35, 1
      %p499 = por %p497, %p498
      %p500 = scmp.ne.s32.totalorder %s489, %s490
      %p501 = scmp.eq.s32.totalorder %s35, 0
      %p502 = por %p500, %p501
      %p503 = scmp.ne.s32.totalorder %s489, %s490
      %p504 = scmp.eq.s32.totalorder %s36, 1
      %p505 = por %p503, %p504
      %p507 = scmp.ne.s32.totalorder %s490, %s506
      %p508 = scmp.eq.s32.totalorder %s36, 0
      %p509 = por %p507, %p508
      %p510 = scmp.le.s32.totalorder 1, %s30
      %p511 = scmp.lt.s32.totalorder %s30, 3
      %p512 = pnand %p510, %p511
      %p513 = pneg %p512
      // Predicated region
      $region9: #{visual_generator_forward.1} parent=5 // pred_check
        _
      $region10: #{visual_generator_forward.1} parent=5 // pred_check_branch
        %515 = sbr.rel (%p512) target = $region12
      $region11: #{visual_generator_forward.1} parent=5 // pred_region
        %s516 = ssub.s32 %s30, 1
        // Predicated region
        $region13: #{visual_generator_forward.1} parent=11 // pred_check
          %p517 = pneg %p77
        $region14: #{visual_generator_forward.1} parent=11 // pred_check_branch
          %519 = sbr.rel (%p517) target = $region16
        $region15: #{visual_generator_forward.1} parent=11 // pred_region
          _
        $region16: #{visual_generator_forward.1} parent=11 // pred_fallthru
          _
        // Predicated region
        $region17: #{visual_generator_forward.1} parent=11 // pred_check
          %p520 = pneg %p98
        $region18: #{visual_generator_forward.1} parent=11 // pred_check_branch
          %522 = sbr.rel (%p520) target = $region20
        $region19: #{visual_generator_forward.1} parent=11 // pred_region
          _
        $region20: #{visual_generator_forward.1} parent=11 // pred_fallthru
          _
        // Predicated region
        $region21: #{visual_generator_forward.1} parent=11 // pred_check
          %p523 = pneg %p119
        $region22: #{visual_generator_forward.1} parent=11 // pred_check_branch
          %525 = sbr.rel (%p523) target = $region24
        $region23: #{visual_generator_forward.1} parent=11 // pred_region
          _
        $region24: #{visual_generator_forward.1} parent=11 // pred_fallthru
          _
        // Predicated region
        $region25: #{visual_generator_forward.1} parent=11 // pred_check
          %p526 = pneg %p140
        $region26: #{visual_generator_forward.1} parent=11 // pred_check_branch
          %528 = sbr.rel (%p526) target = $region28
        $region27: #{visual_generator_forward.1} parent=11 // pred_region
          _
        $region28: #{visual_generator_forward.1} parent=11 // pred_fallthru
          _
        // Predicated region
        $region29: #{visual_generator_forward.1} parent=11 // pred_check
          %p529 = pneg %p161
        $region30: #{visual_generator_forward.1} parent=11 // pred_check_branch
          %531 = sbr.rel (%p529) target = $region32
        $region31: #{visual_generator_forward.1} parent=11 // pred_region
          _
        $region32: #{visual_generator_forward.1} parent=11 // pred_fallthru
          _
        // Predicated region
        $region33: #{visual_generator_forward.1} parent=11 // pred_check
          %p532 = pneg %p182
        $region34: #{visual_generator_forward.1} parent=11 // pred_check_branch
          %534 = sbr.rel (%p532) target = $region36
        $region35: #{visual_generator_forward.1} parent=11 // pred_region
          _
        $region36: #{visual_generator_forward.1} parent=11 // pred_fallthru
          _
        // Predicated region
        $region37: #{visual_generator_forward.1} parent=11 // pred_check
          %p535 = pneg %p203
        $region38: #{visual_generator_forward.1} parent=11 // pred_check_branch
          %537 = sbr.rel (%p535) target = $region40
        $region39: #{visual_generator_forward.1} parent=11 // pred_region
          _
        $region40: #{visual_generator_forward.1} parent=11 // pred_fallthru
          _
        // Predicated region
        $region41: #{visual_generator_forward.1} parent=11 // pred_check
          %p538 = pneg %p224
        $region42: #{visual_generator_forward.1} parent=11 // pred_check_branch
          %540 = sbr.rel (%p538) target = $region44
        $region43: #{visual_generator_forward.1} parent=11 // pred_region
          _
        $region44: #{visual_generator_forward.1} parent=11 // pred_fallthru
          _
        // Predicated region
        $region45: #{visual_generator_forward.1} parent=11 // pred_check
          %p541 = pneg %p245
        $region46: #{visual_generator_forward.1} parent=11 // pred_check_branch
          %543 = sbr.rel (%p541) target = $region48
        $region47: #{visual_generator_forward.1} parent=11 // pred_region
          _
        $region48: #{visual_generator_forward.1} parent=11 // pred_fallthru
          _
        // Predicated region
        $region49: #{visual_generator_forward.1} parent=11 // pred_check
          %p544 = pneg %p266
        $region50: #{visual_generator_forward.1} parent=11 // pred_check_branch
          %546 = sbr.rel (%p544) target = $region52
        $region51: #{visual_generator_forward.1} parent=11 // pred_region
          _
        $region52: #{visual_generator_forward.1} parent=11 // pred_fallthru
          _
        // Predicated region
        $region53: #{visual_generator_forward.1} parent=11 // pred_check
          %p547 = pneg %p287
        $region54: #{visual_generator_forward.1} parent=11 // pred_check_branch
          %549 = sbr.rel (%p547) target = $region56
        $region55: #{visual_generator_forward.1} parent=11 // pred_region
          _
        $region56: #{visual_generator_forward.1} parent=11 // pred_fallthru
          _
        // Predicated region
        $region57: #{visual_generator_forward.1} parent=11 // pred_check
          %p550 = pneg %p308
        $region58: #{visual_generator_forward.1} parent=11 // pred_check_branch
          %552 = sbr.rel (%p550) target = $region60
        $region59: #{visual_generator_forward.1} parent=11 // pred_region
          _
        $region60: #{visual_generator_forward.1} parent=11 // pred_fallthru
          _
        // Predicated region
        $region61: #{visual_generator_forward.1} parent=11 // pred_check
          %p553 = pneg %p329
        $region62: #{visual_generator_forward.1} parent=11 // pred_check_branch
          %555 = sbr.rel (%p553) target = $region64
        $region63: #{visual_generator_forward.1} parent=11 // pred_region
          _
        $region64: #{visual_generator_forward.1} parent=11 // pred_fallthru
          _
        // Predicated region
        $region65: #{visual_generator_forward.1} parent=11 // pred_check
          %p556 = pneg %p350
        $region66: #{visual_generator_forward.1} parent=11 // pred_check_branch
          %558 = sbr.rel (%p556) target = $region68
        $region67: #{visual_generator_forward.1} parent=11 // pred_region
          _
        $region68: #{visual_generator_forward.1} parent=11 // pred_fallthru
          _
        // Predicated region
        $region69: #{visual_generator_forward.1} parent=11 // pred_check
          %p559 = pneg %p371
        $region70: #{visual_generator_forward.1} parent=11 // pred_check_branch
          %561 = sbr.rel (%p559) target = $region72
        $region71: #{visual_generator_forward.1} parent=11 // pred_region
          _
        $region72: #{visual_generator_forward.1} parent=11 // pred_fallthru
          _
        // Predicated region
        $region73: #{visual_generator_forward.1} parent=11 // pred_check
          %p562 = pneg %p392
        $region74: #{visual_generator_forward.1} parent=11 // pred_check_branch
          %564 = sbr.rel (%p562) target = $region76
        $region75: #{visual_generator_forward.1} parent=11 // pred_region
          _
        $region76: #{visual_generator_forward.1} parent=11 // pred_fallthru
          _
        // Predicated region
        $region77: #{visual_generator_forward.1} parent=11 // pred_check
          %p565 = pneg %p413
        $region78: #{visual_generator_forward.1} parent=11 // pred_check_branch
          %567 = sbr.rel (%p565) target = $region80
        $region79: #{visual_generator_forward.1} parent=11 // pred_region
          _
        $region80: #{visual_generator_forward.1} parent=11 // pred_fallthru
          _
        // Predicated region
        $region81: #{visual_generator_forward.1} parent=11 // pred_check
          %p568 = pneg %p434
        $region82: #{visual_generator_forward.1} parent=11 // pred_check_branch
          %570 = sbr.rel (%p568) target = $region84
        $region83: #{visual_generator_forward.1} parent=11 // pred_region
          _
        $region84: #{visual_generator_forward.1} parent=11 // pred_fallthru
          _
        // Predicated region
        $region85: #{visual_generator_forward.1} parent=11 // pred_check
          %p571 = pneg %p455
        $region86: #{visual_generator_forward.1} parent=11 // pred_check_branch
          %573 = sbr.rel (%p571) target = $region88
        $region87: #{visual_generator_forward.1} parent=11 // pred_region
          _
        $region88: #{visual_generator_forward.1} parent=11 // pred_fallthru
          _
        // Predicated region
        $region89: #{visual_generator_forward.1} parent=11 // pred_check
          %p574 = pneg %p476
        $region90: #{visual_generator_forward.1} parent=11 // pred_check_branch
          %576 = sbr.rel (%p574) target = $region92
        $region91: #{visual_generator_forward.1} parent=11 // pred_region
          _
        $region92: #{visual_generator_forward.1} parent=11 // pred_fallthru
          _
      $region12: #{visual_generator_forward.1} parent=5 // pred_fallthru
        _
      %p577 = scmp.lt.s32.totalorder %s30, 2
      // Predicated region
      $region93: #{visual_generator_forward.1} parent=5 // pred_check
        %p578 = pneg %p577
      $region94: #{visual_generator_forward.1} parent=5 // pred_check_branch
        %580 = sbr.rel (%p578) target = $region96
      $region95: #{visual_generator_forward.1} parent=5 // pred_region
        // Predicated region
        $region97: #{visual_generator_forward.1} parent=95 // pred_check
          %p581 = pneg %p50
        $region98: #{visual_generator_forward.1} parent=95 // pred_check_branch
          %583 = sbr.rel (%p581) target = $region100
        $region99: #{visual_generator_forward.1} parent=95 // pred_region
          %p584 = scmp.lt.s32.totalorder %s30, 1
          %s585 = scalar_select %p584, %s30, 1
          %s586 = smul.addr %s585, 2
          %s587 = smul.addr %s586, 2
          %s588 = scalar_lea.vmem %s0, %s587
        $region100: #{visual_generator_forward.1} parent=95 // pred_fallthru
          _
      $region96: #{visual_generator_forward.1} parent=5 // pred_fallthru
        _
      %p589 = scmp.le.s32.totalorder 1, %s30
      %p590 = scmp.lt.s32.totalorder %s30, 3
      %p591 = pnand %p589, %p590
      %p592 = pneg %p591
      // Predicated region
      $region101: #{visual_generator_forward.1} parent=5 // pred_check
        _
      $region102: #{visual_generator_forward.1} parent=5 // pred_check_branch
        %594 = sbr.rel (%p591) target = $region104
      $region103: #{visual_generator_forward.1} parent=5 // pred_region
        %s595 = ssub.s32 %s30, 1
        %p596 = scmp.lt.s32.totalorder %s35, 1
        %s597 = scalar_select %p596, %s35, 1
        %s598 = smul.addr %s597, 2
        %s599 = smul.addr %s598, 2
        %s600 = scalar_lea.vmem %s0, %s599
        %p601 = pneg %p56
        %p602 = pneg %p53
        %p603 = pneg %p77
        %p604 = pneg %p74
        %p605 = pneg %p98
        %p606 = pneg %p95
        %p607 = pneg %p119
        %p608 = pneg %p116
        %p609 = pneg %p140
        %p610 = pneg %p137
        %p611 = pneg %p161
        %p612 = pneg %p158
        %p613 = pneg %p182
        %p614 = pneg %p179
        %p615 = pneg %p203
        %p616 = pneg %p200
        %p617 = pneg %p224
        %p618 = pneg %p221
        %p619 = pneg %p245
        %p620 = pneg %p242
        %p621 = pneg %p266
        %p622 = pneg %p263
        %p623 = pneg %p287
        %p624 = pneg %p284
        %p625 = pneg %p308
        %p626 = pneg %p305
        %p627 = pneg %p329
        %p628 = pneg %p326
        %p629 = pneg %p350
        %p630 = pneg %p347
        %p631 = pneg %p371
        %p632 = pneg %p368
        %p633 = pneg %p392
        %p634 = pneg %p389
        %p635 = pneg %p413
        %p636 = pneg %p410
        %p637 = pneg %p434
        %p638 = pneg %p431
        %p639 = pneg %p455
        %p640 = pneg %p452
        %p641 = pneg %p476
        %p642 = pneg %p473
        %p643 = pneg %p502
        %p644 = pneg %p499
        %s645 = sand.u32 %s489, 1
        %s646 = scalar_lea.sflag [#allocation3], %s645
        %s647 = sand.u32 %s489, 1
        %s648 = smul.addr %s647, 2
        %s649 = scalar_lea.vmem [#allocation2], %s648
        %p650 = scmp.lt.s32.totalorder %s35, 1
        %s651 = scalar_select %p650, %s35, 1
        %s652 = smul.addr %s651, 2
        %s653 = smul.addr %s652, 2
        %s654 = scalar_lea.vmem %s0, %s653
        %v656 = vld [vmem:[%s654] sm:$0xf]
        %v657 = vld [vmem:[%s2] sm:$0xf]
        %v658 = vld [vmem:[%s2 + $0x4] sm:$0xf]
        %v659 = vld [vmem:[%s2 + $0x8] sm:$0xf]
        %v660 = vld [vmem:[%s2 + $0xc] sm:$0xf]
        %v661 = vld [vmem:[%s2 + $0x10] sm:$0xf]
        %v662 = vld [vmem:[%s2 + $0x14] sm:$0xf]
        %v663 = vld [vmem:[%s2 + $0x18] sm:$0xf]
        %v664 = vld [vmem:[%s2 + $0x1c] sm:$0xf]
        %v665 = vld [vmem:[%s2 + $0x20] sm:$0xf]
        %v666 = vld [vmem:[%s2 + $0x24] sm:$0xf]
        %v667 = vld [vmem:[%s2 + $0x28] sm:$0xf]
        %v668 = vld [vmem:[%s2 + $0x2c] sm:$0xf]
        %v669 = vld [vmem:[%s2 + $0x30] sm:$0xf]
        %v670 = vld [vmem:[%s2 + $0x34] sm:$0xf]
        %v671 = vld [vmem:[%s2 + $0x38] sm:$0xf]
        %v672 = vld [vmem:[%s2 + $0x3c] sm:$0xf]
        %v673 = vld [vmem:[%s2 + $0x40] sm:$0xf]
        %v674 = vld [vmem:[%s2 + $0x44] sm:$0xf]
        %v675 = vld [vmem:[%s2 + $0x48] sm:$0xf]
        %v676 = vld [vmem:[%s2 + $0x4c] sm:$0xf]
        %v677 = vld [vmem:[%s2 + $0x50] sm:$0xf]
        %v678 = vld [vmem:[%s2 + $0x54] sm:$0xf]
        %v679 = vld [vmem:[%s2 + $0x58] sm:$0xf]
        %v680 = vld [vmem:[%s2 + $0x5c] sm:$0xf]
        %682 = vst [vmem:[#allocation1] ss:$4 sm:$0xff] %v656
        %v683 = vld.sshfl [vmem:[#allocation1] sm:$0xff pattern:$0x73625140]
        %v684 = vld.sshfl [vmem:[#allocation1 + $0x8] sm:$0xff pattern:$0x73625140]
        %v710 = vunpack.c.l.b16 %v657
        %v711 = vunpack.c.l.b16 %v658
        %v712 = vunpack.c.l.b16 %v659
        %v713 = vunpack.c.l.b16 %v660
        %v714 = vunpack.c.l.b16 %v661
        %v715 = vunpack.c.l.b16 %v662
        %v716 = vunpack.c.l.b16 %v663
        %v717 = vunpack.c.l.b16 %v664
        %v718 = vunpack.c.l.b16 %v665
        %v719 = vunpack.c.l.b16 %v666
        %v720 = vunpack.c.l.b16 %v667
        %v721 = vunpack.c.l.b16 %v668
        %v722 = vunpack.c.l.b16 %v669
        %v723 = vunpack.c.l.b16 %v670
        %v724 = vunpack.c.l.b16 %v671
        %v725 = vunpack.c.l.b16 %v672
        %v726 = vunpack.c.l.b16 %v673
        %v727 = vunpack.c.l.b16 %v674
        %v728 = vunpack.c.l.b16 %v675
        %v729 = vunpack.c.l.b16 %v676
        %v730 = vunpack.c.l.b16 %v677
        %v731 = vunpack.c.l.b16 %v678
        %v732 = vunpack.c.l.b16 %v679
        %v733 = vunpack.c.l.b16 %v680
        %v734 = vpack.c.b16 %v711, %v710
        %v735 = vpack.c.b16 %v713, %v712
        %v736 = vpack.c.b16 %v715, %v714
        %v737 = vpack.c.b16 %v717, %v716
        %v738 = vpack.c.b16 %v719, %v718
        %v739 = vpack.c.b16 %v721, %v720
        %v740 = vpack.c.b16 %v723, %v722
        %v741 = vpack.c.b16 %v725, %v724
        %v742 = vpack.c.b16 %v727, %v726
        %v743 = vpack.c.b16 %v729, %v728
        %v744 = vpack.c.b16 %v731, %v730
        %v745 = vpack.c.b16 %v733, %v732
        %vm758 = vcmask 523264
        %v759 = vsel %vm758, %v684, 0
        %761 = vmatpush.bf16.msra.mxu0 %v741
        %762 = vmatpush.bf16.msra.mxu0 %v740
        %763 = vmatpush.bf16.msra.mxu0 %v739
        %764 = vmatpush.bf16.msra.mxu0 %v738
        %765 = vmatpush.bf16.msra.mxu0 %v737
        %766 = vmatpush.bf16.msra.mxu0 %v736
        %767 = vmatpush.bf16.msra.mxu0 %v735
        %768 = vmatpush.bf16.msra.mxu0 %v734
        %769 = vmatmul.bf16.gmra.mxu0 %v683
        %v770 = vpop.f32.mrf.mxu0
        %v771 = vadd.f32 0.0, %v770
        %v772 = vpop.f32.mrf.mxu0
        %773 = vdwg.mxu0
        %774 = vmatpush.bf16.msra.mxu0 0
        %775 = vmatpush.bf16.msra.mxu0 0
        %776 = vmatpush.bf16.msra.mxu0 0
        %777 = vmatpush.bf16.msra.mxu0 0
        %778 = vmatpush.bf16.msra.mxu0 %v745
        %779 = vmatpush.bf16.msra.mxu0 %v744
        %780 = vmatpush.bf16.msra.mxu0 %v743
        %781 = vmatpush.bf16.msra.mxu0 %v742
        %782 = vmatmul.bf16.gmra.mxu0 %v759
        %v783 = vpop.f32.mrf.mxu0
        %v784 = vadd.f32 %v771, %v783
        %v785 = vpop.f32.mrf.mxu0
        %786 = vdwg.mxu0
        %v787 = vld [vmem:[%s3] sm:$0xf]
        %v788 = vadd.f32 %v784, %v787
        %v789 = vld [vmem:[%s1] sm:$0x3]
        %v791 = vrot.slane %v788, 6
        %vm793 = vcmask 1041408
        %v794 = vsel %vm793, %v789, %v791
        %v795 = vld [vmem:[%s4] sm:$0x1]
        %v796 = vld [vmem:[%s5] sm:$0x1]
        %vm797 = vcmask 259072
        %v798 = vsel %vm797, %v794, 0.0
        %799 = vadd.xlane.f32.xlu0 %v798
        %v800 = vpop.xlane.xlu0 %799
        %v801 = vrcp.pop 32.0
        %v802 = vmul.f32 32.0, %v801
        %v803 = vsub.f32 1.0, %v802
        %v804 = vmul.f32 %v801, %v803
        %v805 = vadd.f32 %v801, %v804
        %vm806 = vweird.f32 %v801
        %v807 = vsel %vm806, %v801, %v805
        %v808 = vmul.f32 %v800, %v807
        %v809 = vsub.f32 %v794, %v808
        %v810 = vmul.f32 %v809, %v809
        %v811 = vsel %vm797, %v810, 0.0
        %812 = vadd.xlane.f32.xlu0 %v811
        %v813 = vpop.xlane.xlu0 %812
        %v814 = vmul.f32 %v813, %v807
        %v815 = vadd.f32 %v814, 1e-05
        %v816 = vrsqrt.pop %v815
        %v817 = vmul.f32 %v816, %v815
        %v818 = vmul.f32 %v817, %v816
        %v819 = vmul.f32 0.5, %v818
        %v820 = vsub.f32 1.5, %v819
        %v821 = vmul.f32 %v816, %v820
        %vm822 = vweird.f32 %v815
        %vm823 = vweird.f32 %v816
        %vm824 = vmor %vm822, %vm823
        %v825 = vsel %vm824, %v816, %v821
        %v826 = vmul.f32 %v809, %v825
        %v828 = vperm.slane %v795, 0
        %v830 = vmul.f32 %v826, %v828
        %v832 = vperm.slane %v796, 0
        %v834 = vadd.f32 %v830, %v832
        %v835 = vld [vmem:[%s6] sm:$0x1]
        %v836 = vld [vmem:[%s7] sm:$0x1]
        %v837 = vsel %vm797, %v834, 0.0
        %838 = vadd.xlane.f32.xlu0 %v837
        %v839 = vpop.xlane.xlu0 %838
        %v840 = vmul.f32 %v839, %v807
        %v841 = vsub.f32 %v834, %v840
        %v842 = vmul.f32 %v841, %v841
        %v843 = vsel %vm797, %v842, 0.0
        %844 = vadd.xlane.f32.xlu0 %v843
        %v845 = vpop.xlane.xlu0 %844
        %v846 = vmul.f32 %v845, %v807
        %v847 = vadd.f32 %v846, 1e-05
        %v848 = vrsqrt.pop %v847
        %v849 = vmul.f32 %v848, %v847
        %v850 = vmul.f32 %v849, %v848
        %v851 = vmul.f32 0.5, %v850
        %v852 = vsub.f32 1.5, %v851
        %v853 = vmul.f32 %v848, %v852
        %vm854 = vweird.f32 %v847
        %vm855 = vweird.f32 %v848
        %vm856 = vmor %vm854, %vm855
        %v857 = vsel %vm856, %v848, %v853
        %v858 = vmul.f32 %v841, %v857
        %v860 = vperm.slane %v835, 0
        %v862 = vmul.f32 %v858, %v860
        %v864 = vperm.slane %v836, 0
        %v866 = vadd.f32 %v862, %v864
        %v867 = vpack.c.bf16 %v866, %v866
        %v868 = vld [vmem:[%s8] sm:$0xf]
        %v869 = vld [vmem:[%s8 + $0x4] sm:$0xf]
        %v870 = vld [vmem:[%s8 + $0x8] sm:$0xf]
        %v871 = vld [vmem:[%s8 + $0xc] sm:$0xf]
        %v872 = vld [vmem:[%s9] sm:$0x1]
        %v874 = vperm.slane %v872, 0
        %v880 = vunpack.c.l.b16 %v868
        %v881 = vunpack.c.l.b16 %v869
        %v882 = vunpack.c.l.b16 %v870
        %v883 = vunpack.c.l.b16 %v871
        %v884 = vpack.c.b16 %v881, %v880
        %v885 = vpack.c.b16 %v883, %v882
        %vm888 = vcmask 261120
        %v890 = vsel %vm888, %v867, 0
        %892 = vmatpush.bf16.msra.mxu0 0
        %893 = vmatpush.bf16.msra.mxu0 0
        %894 = vmatpush.bf16.msra.mxu0 0
        %895 = vmatpush.bf16.msra.mxu0 0
        %896 = vmatpush.bf16.msra.mxu0 0
        %897 = vmatpush.bf16.msra.mxu0 0
        %898 = vmatpush.bf16.msra.mxu0 %v885
        %899 = vmatpush.bf16.msra.mxu0 %v884
        %900 = vmatmul.bf16.gmra.mxu0 %v890
        %v901 = vpop.f32.mrf.mxu0
        %v902 = vadd.f32 %v874, %v901
        %v903 = vpop.f32.mrf.mxu0
        %904 = vdwg.mxu0
        %v905 = vmul.f32 %v902, 0.35355338
        %v906 = vpack.c.bf16 %v905, %v905
        %v907 = vpack.c.bf16 %v902, %v902
        %v909 = vunpack.c.l.b16 %v907
        %v910 = vpack.c.b16 %v909, %v909
        %911 = vrot.lane.b32.xlu0 %v910, 96
        %v912 = vpop.permute.xlu0 %911
        %vm913 = vcmask 64512
        %v915 = vsel %vm913, %v906, 0
        %v918 = vsel %vm913, %v912, 0
        %920 = vmatpush.bf16.xpose.msra.mxu0 0
        %921 = vmatpush.bf16.xpose.msra.mxu0 0
        %922 = vmatpush.bf16.xpose.msra.mxu0 0
        %923 = vmatpush.bf16.xpose.msra.mxu0 0
        %924 = vmatpush.bf16.xpose.msra.mxu0 0
        %925 = vmatpush.bf16.xpose.msra.mxu0 0
        %926 = vmatpush.bf16.xpose.msra.mxu0 0
        %927 = vmatpush.bf16.xpose.msra.mxu0 %v918
        %928 = vmatmul.bf16.gmra.mxu0 %v915
        %v929 = vpop.f32.mrf.mxu0
        %v930 = vadd.f32 0.0, %v929
        %v931 = vpop.f32.mrf.mxu0
        %932 = vdwg.mxu0
        %vm933 = vcmask 46080
        %v934 = vsel %vm933, %v930, -inf
        %935 = vmax.xlane.f32.xlu0 %v934
        %v936 = vpop.xlane.xlu0 %935
        %v937 = vsub.f32 %v930, %v936
        %v938 = vmul.f32 %v937, 1.442695
        %v939 = vpow.pop %v938
        %v940 = vsel %vm933, %v939, 0.0
        %941 = vadd.xlane.f32.xlu0 %v940
        %v942 = vpop.xlane.xlu0 %941
        %v943 = vrcp.pop %v942
        %v944 = vmul.f32 %v942, %v943
        %v945 = vsub.f32 1.0, %v944
        %v946 = vmul.f32 %v943, %v945
        %v947 = vadd.f32 %v943, %v946
        %vm948 = vweird.f32 %v942
        %vm949 = vweird.f32 %v943
        %vm950 = vmor %vm948, %vm949
        %v951 = vsel %vm950, %v943, %v947
        %v952 = vand.u32 2147483647, %v942
        %vm953 = vcmp.eq.f32.partialorder %v952, 8.507059e+37
        %v954 = vand.u32 %v942, 2147483648
        %v955 = vor.u32 1.1754944e-38, %v954
        %v956 = vsel %vm953, %v955, %v951
        %v957 = vmul.f32 %v939, %v956
        %v958 = vpack.c.bf16 %v957, %v957
        %959 = vrot.lane.b32.xlu0 %v910, 64
        %v960 = vpop.permute.xlu0 %959
        %vm961 = vcmask 48128
        %v963 = vsel %vm961, %v958, 0
        %vm965 = vcmask 1042432
        %v967 = vsel %vm965, %v960, 0
        %969 = vmatpush.bf16.msra.mxu0 0
        %970 = vmatpush.bf16.msra.mxu0 0
        %971 = vmatpush.bf16.msra.mxu0 0
        %972 = vmatpush.bf16.msra.mxu0 0
        %973 = vmatpush.bf16.msra.mxu0 0
        %974 = vmatpush.bf16.msra.mxu0 0
        %975 = vmatpush.bf16.msra.mxu0 0
        %976 = vmatpush.bf16.msra.mxu0 %v967
        %977 = vmatmul.bf16.gmra.mxu0 %v963
        %v978 = vpop.f32.mrf.mxu0
        %v979 = vadd.f32 0.0, %v978
        %v980 = vpop.f32.mrf.mxu0
        %981 = vdwg.mxu0
        %v983 = vunpack.c.l.b16 %v906
        %v984 = vpack.c.b16 %v983, %v983
        %985 = vrot.lane.b32.xlu0 %v984, 120
        %v986 = vpop.permute.xlu0 %985
        %987 = vrot.lane.b32.xlu0 %v910, 88
        %v988 = vpop.permute.xlu0 %987
        %v990 = vsel %vm913, %v986, 0
        %v993 = vsel %vm913, %v988, 0
        %995 = vmatpush.bf16.xpose.msra.mxu0 0
        %996 = vmatpush.bf16.xpose.msra.mxu0 0
        %997 = vmatpush.bf16.xpose.msra.mxu0 0
        %998 = vmatpush.bf16.xpose.msra.mxu0 0
        %999 = vmatpush.bf16.xpose.msra.mxu0 0
        %1000 = vmatpush.bf16.xpose.msra.mxu0 0
        %1001 = vmatpush.bf16.xpose.msra.mxu0 0
        %1002 = vmatpush.bf16.xpose.msra.mxu0 %v993
        %1003 = vmatmul.bf16.gmra.mxu0 %v990
        %v1004 = vpop.f32.mrf.mxu0
        %v1005 = vadd.f32 0.0, %v1004
        %v1006 = vpop.f32.mrf.mxu0
        %1007 = vdwg.mxu0
        %v1008 = vsel %vm933, %v1005, -inf
        %1009 = vmax.xlane.f32.xlu0 %v1008
        %v1010 = vpop.xlane.xlu0 %1009
        %v1011 = vsub.f32 %v1005, %v1010
        %v1012 = vmul.f32 %v1011, 1.442695
        %v1013 = vpow.pop %v1012
        %v1014 = vsel %vm933, %v1013, 0.0
        %1015 = vadd.xlane.f32.xlu0 %v1014
        %v1016 = vpop.xlane.xlu0 %1015
        %v1017 = vrcp.pop %v1016
        %v1018 = vmul.f32 %v1016, %v1017
        %v1019 = vsub.f32 1.0, %v1018
        %v1020 = vmul.f32 %v1017, %v1019
        %v1021 = vadd.f32 %v1017, %v1020
        %vm1022 = vweird.f32 %v1016
        %vm1023 = vweird.f32 %v1017
        %vm1024 = vmor %vm1022, %vm1023
        %v1025 = vsel %vm1024, %v1017, %v1021
        %v1026 = vand.u32 2147483647, %v1016
        %vm1027 = vcmp.eq.f32.partialorder %v1026, 8.507059e+37
        %v1028 = vand.u32 %v1016, 2147483648
        %v1029 = vor.u32 1.1754944e-38, %v1028
        %v1030 = vsel %vm1027, %v1029, %v1025
        %v1031 = vmul.f32 %v1013, %v1030
        %v1032 = vpack.c.bf16 %v1031, %v1031
        %1033 = vrot.lane.b32.xlu0 %v910, 56
        %v1034 = vpop.permute.xlu0 %1033
        %v1036 = vsel %vm961, %v1032, 0
        %v1039 = vsel %vm965, %v1034, 0
        %1041 = vmatpush.bf16.msra.mxu0 0
        %1042 = vmatpush.bf16.msra.mxu0 0
        %1043 = vmatpush.bf16.msra.mxu0 0
        %1044 = vmatpush.bf16.msra.mxu0 0
        %1045 = vmatpush.bf16.msra.mxu0 0
        %1046 = vmatpush.bf16.msra.mxu0 0
        %1047 = vmatpush.bf16.msra.mxu0 0
        %1048 = vmatpush.bf16.msra.mxu0 %v1039
        %1049 = vmatmul.bf16.gmra.mxu0 %v1036
        %v1050 = vpop.f32.mrf.mxu0
        %v1051 = vadd.f32 0.0, %v1050
        %v1052 = vpop.f32.mrf.mxu0
        %1053 = vdwg.mxu0
        %1054 = vrot.lane.b32.xlu0 %v984, 112
        %v1055 = vpop.permute.xlu0 %1054
        %1056 = vrot.lane.b32.xlu0 %v910, 80
        %v1057 = vpop.permute.xlu0 %1056
        %v1059 = vsel %vm913, %v1055, 0
        %v1062 = vsel %vm913, %v1057, 0
        %1064 = vmatpush.bf16.xpose.msra.mxu0 0
        %1065 = vmatpush.bf16.xpose.msra.mxu0 0
        %1066 = vmatpush.bf16.xpose.msra.mxu0 0
        %1067 = vmatpush.bf16.xpose.msra.mxu0 0
        %1068 = vmatpush.bf16.xpose.msra.mxu0 0
        %1069 = vmatpush.bf16.xpose.msra.mxu0 0
        %1070 = vmatpush.bf16.xpose.msra.mxu0 0
        %1071 = vmatpush.bf16.xpose.msra.mxu0 %v1062
        %1072 = vmatmul.bf16.gmra.mxu0 %v1059
        %v1073 = vpop.f32.mrf.mxu0
        %v1074 = vadd.f32 0.0, %v1073
        %v1075 = vpop.f32.mrf.mxu0
        %1076 = vdwg.mxu0
        %v1077 = vsel %vm933, %v1074, -inf
        %1078 = vmax.xlane.f32.xlu0 %v1077
        %v1079 = vpop.xlane.xlu0 %1078
        %v1080 = vsub.f32 %v1074, %v1079
        %v1081 = vmul.f32 %v1080, 1.442695
        %v1082 = vpow.pop %v1081
        %v1083 = vsel %vm933, %v1082, 0.0
        %1084 = vadd.xlane.f32.xlu0 %v1083
        %v1085 = vpop.xlane.xlu0 %1084
        %v1086 = vrcp.pop %v1085
        %v1087 = vmul.f32 %v1085, %v1086
        %v1088 = vsub.f32 1.0, %v1087
        %v1089 = vmul.f32 %v1086, %v1088
        %v1090 = vadd.f32 %v1086, %v1089
        %vm1091 = vweird.f32 %v1085
        %vm1092 = vweird.f32 %v1086
        %vm1093 = vmor %vm1091, %vm1092
        %v1094 = vsel %vm1093, %v1086, %v1090
        %v1095 = vand.u32 2147483647, %v1085
        %vm1096 = vcmp.eq.f32.partialorder %v1095, 8.507059e+37
        %v1097 = vand.u32 %v1085, 2147483648
        %v1098 = vor.u32 1.1754944e-38, %v1097
        %v1099 = vsel %vm1096, %v1098, %v1094
        %v1100 = vmul.f32 %v1082, %v1099
        %v1101 = vpack.c.bf16 %v1100, %v1100
        %1102 = vrot.lane.b32.xlu0 %v910, 48
        %v1103 = vpop.permute.xlu0 %1102
        %v1105 = vsel %vm961, %v1101, 0
        %v1108 = vsel %vm965, %v1103, 0
        %1110 = vmatpush.bf16.msra.mxu0 0
        %1111 = vmatpush.bf16.msra.mxu0 0
        %1112 = vmatpush.bf16.msra.mxu0 0
        %1113 = vmatpush.bf16.msra.mxu0 0
        %1114 = vmatpush.bf16.msra.mxu0 0
        %1115 = vmatpush.bf16.msra.mxu0 0
        %1116 = vmatpush.bf16.msra.mxu0 0
        %1117 = vmatpush.bf16.msra.mxu0 %v1108
        %1118 = vmatmul.bf16.gmra.mxu0 %v1105
        %v1119 = vpop.f32.mrf.mxu0
        %v1120 = vadd.f32 0.0, %v1119
        %v1121 = vpop.f32.mrf.mxu0
        %1122 = vdwg.mxu0
        %1123 = vrot.lane.b32.xlu0 %v984, 104
        %v1124 = vpop.permute.xlu0 %1123
        %1125 = vrot.lane.b32.xlu0 %v910, 72
        %v1126 = vpop.permute.xlu0 %1125
        %v1128 = vsel %vm913, %v1124, 0
        %v1131 = vsel %vm913, %v1126, 0
        %1133 = vmatpush.bf16.xpose.msra.mxu0 0
        %1134 = vmatpush.bf16.xpose.msra.mxu0 0
        %1135 = vmatpush.bf16.xpose.msra.mxu0 0
        %1136 = vmatpush.bf16.xpose.msra.mxu0 0
        %1137 = vmatpush.bf16.xpose.msra.mxu0 0
        %1138 = vmatpush.bf16.xpose.msra.mxu0 0
        %1139 = vmatpush.bf16.xpose.msra.mxu0 0
        %1140 = vmatpush.bf16.xpose.msra.mxu0 %v1131
        %1141 = vmatmul.bf16.gmra.mxu0 %v1128
        %v1142 = vpop.f32.mrf.mxu0
        %v1143 = vadd.f32 0.0, %v1142
        %v1144 = vpop.f32.mrf.mxu0
        %1145 = vdwg.mxu0
        %v1146 = vsel %vm933, %v1143, -inf
        %1147 = vmax.xlane.f32.xlu0 %v1146
        %v1148 = vpop.xlane.xlu0 %1147
        %v1149 = vsub.f32 %v1143, %v1148
        %v1150 = vmul.f32 %v1149, 1.442695
        %v1151 = vpow.pop %v1150
        %v1152 = vsel %vm933, %v1151, 0.0
        %1153 = vadd.xlane.f32.xlu0 %v1152
        %v1154 = vpop.xlane.xlu0 %1153
        %v1155 = vrcp.pop %v1154
        %v1156 = vmul.f32 %v1154, %v1155
        %v1157 = vsub.f32 1.0, %v1156
        %v1158 = vmul.f32 %v1155, %v1157
        %v1159 = vadd.f32 %v1155, %v1158
        %vm1160 = vweird.f32 %v1154
        %vm1161 = vweird.f32 %v1155
        %vm1162 = vmor %vm1160, %vm1161
        %v1163 = vsel %vm1162, %v1155, %v1159
        %v1164 = vand.u32 2147483647, %v1154
        %vm1165 = vcmp.eq.f32.partialorder %v1164, 8.507059e+37
        %v1166 = vand.u32 %v1154, 2147483648
        %v1167 = vor.u32 1.1754944e-38, %v1166
        %v1168 = vsel %vm1165, %v1167, %v1163
        %v1169 = vmul.f32 %v1151, %v1168
        %v1170 = vpack.c.bf16 %v1169, %v1169
        %1171 = vrot.lane.b32.xlu0 %v910, 40
        %v1172 = vpop.permute.xlu0 %1171
        %v1174 = vsel %vm961, %v1170, 0
        %v1177 = vsel %vm965, %v1172, 0
        %1179 = vmatpush.bf16.msra.mxu0 0
        %1180 = vmatpush.bf16.msra.mxu0 0
        %1181 = vmatpush.bf16.msra.mxu0 0
        %1182 = vmatpush.bf16.msra.mxu0 0
        %1183 = vmatpush.bf16.msra.mxu0 0
        %1184 = vmatpush.bf16.msra.mxu0 0
        %1185 = vmatpush.bf16.msra.mxu0 0
        %1186 = vmatpush.bf16.msra.mxu0 %v1177
        %1187 = vmatmul.bf16.gmra.mxu0 %v1174
        %v1188 = vpop.f32.mrf.mxu0
        %v1189 = vadd.f32 0.0, %v1188
        %v1190 = vpop.f32.mrf.mxu0
        %1191 = vdwg.mxu0
        %1193 = vrot.lane.b32.xlu0 %v1051, 8
        %v1194 = vpop.permute.xlu0 %1193
        %1197 = vrot.lane.b32.xlu0 %v1120, 16
        %v1198 = vpop.permute.xlu0 %1197
        %1201 = vrot.lane.b32.xlu0 %v1189, 24
        %v1202 = vpop.permute.xlu0 %1201
        %v1204 = vsel %vm913, %v979, %v1194
        %vm1205 = vcmask 130048
        %v1206 = vsel %vm1205, %v1204, %v1198
        %vm1207 = vcmask 195584
        %v1208 = vsel %vm1207, %v1206, %v1202
        %v1209 = vpack.c.bf16 %v1208, %v1208
        %v1210 = vld [vmem:[%s10] sm:$0xf]
        %v1211 = vld [vmem:[%s10 + $0x4] sm:$0xf]
        %v1212 = vld [vmem:[%s10 + $0x8] sm:$0xf]
        %v1213 = vld [vmem:[%s10 + $0xc] sm:$0xf]
        %v1218 = vunpack.c.l.b16 %v1210
        %v1219 = vunpack.c.l.b16 %v1211
        %v1220 = vunpack.c.l.b16 %v1212
        %v1221 = vunpack.c.l.b16 %v1213
        %v1222 = vpack.c.b16 %v1219, %v1218
        %v1223 = vpack.c.b16 %v1221, %v1220
        %v1227 = vsel %vm888, %v1209, 0
        %1229 = vmatpush.bf16.msra.mxu0 0
        %1230 = vmatpush.bf16.msra.mxu0 0
        %1231 = vmatpush.bf16.msra.mxu0 0
        %1232 = vmatpush.bf16.msra.mxu0 0
        %1233 = vmatpush.bf16.msra.mxu0 0
        %1234 = vmatpush.bf16.msra.mxu0 0
        %1235 = vmatpush.bf16.msra.mxu0 %v1223
        %1236 = vmatpush.bf16.msra.mxu0 %v1222
        %1237 = vmatmul.bf16.gmra.mxu0 %v1227
        %v1238 = vpop.f32.mrf.mxu0
        %v1239 = vadd.f32 0.0, %v1238
        %v1240 = vpop.f32.mrf.mxu0
        %1241 = vdwg.mxu0
        %v1242 = vadd.f32 %v834, %v1239
        %v1243 = vld [vmem:[%s11] sm:$0x1]
        %v1245 = vperm.slane %v1243, 0
        %v1247 = vadd.f32 %v1242, %v1245
        %v1248 = vld [vmem:[%s12] sm:$0x1]
        %v1249 = vld [vmem:[%s13] sm:$0x1]
        %v1250 = vsel %vm797, %v1247, 0.0
        %1251 = vadd.xlane.f32.xlu0 %v1250
        %v1252 = vpop.xlane.xlu0 %1251
        %v1253 = vmul.f32 %v1252, %v807
        %v1254 = vsub.f32 %v1247, %v1253
        %v1255 = vmul.f32 %v1254, %v1254
        %v1256 = vsel %vm797, %v1255, 0.0
        %1257 = vadd.xlane.f32.xlu0 %v1256
        %v1258 = vpop.xlane.xlu0 %1257
        %v1259 = vmul.f32 %v1258, %v807
        %v1260 = vadd.f32 %v1259, 1e-05
        %v1261 = vrsqrt.pop %v1260
        %v1262 = vmul.f32 %v1261, %v1260
        %v1263 = vmul.f32 %v1262, %v1261
        %v1264 = vmul.f32 0.5, %v1263
        %v1265 = vsub.f32 1.5, %v1264
        %v1266 = vmul.f32 %v1261, %v1265
        %vm1267 = vweird.f32 %v1260
        %vm1268 = vweird.f32 %v1261
        %vm1269 = vmor %vm1267, %vm1268
        %v1270 = vsel %vm1269, %v1261, %v1266
        %v1271 = vmul.f32 %v1254, %v1270
        %v1273 = vperm.slane %v1248, 0
        %v1275 = vmul.f32 %v1271, %v1273
        %v1277 = vperm.slane %v1249, 0
        %v1279 = vadd.f32 %v1275, %v1277
        %v1280 = vpack.c.bf16 %v1279, %v1279
        %v1281 = vld [vmem:[%s14] sm:$0xf]
        %v1282 = vld [vmem:[%s14 + $0x4] sm:$0xf]
        %v1283 = vld [vmem:[%s14 + $0x8] sm:$0xf]
        %v1284 = vld [vmem:[%s14 + $0xc] sm:$0xf]
        %v1285 = vld [vmem:[%s15] sm:$0x1]
        %v1287 = vperm.slane %v1285, 0
        %v1293 = vunpack.c.l.b16 %v1281
        %v1294 = vunpack.c.l.b16 %v1282
        %v1295 = vunpack.c.l.b16 %v1283
        %v1296 = vunpack.c.l.b16 %v1284
        %v1297 = vpack.c.b16 %v1294, %v1293
        %v1298 = vpack.c.b16 %v1296, %v1295
        %v1302 = vsel %vm888, %v1280, 0
        %1304 = vmatpush.bf16.msra.mxu0 0
        %1305 = vmatpush.bf16.msra.mxu0 0
        %1306 = vmatpush.bf16.msra.mxu0 0
        %1307 = vmatpush.bf16.msra.mxu0 0
        %1308 = vmatpush.bf16.msra.mxu0 0
        %1309 = vmatpush.bf16.msra.mxu0 0
        %1310 = vmatpush.bf16.msra.mxu0 %v1298
        %1311 = vmatpush.bf16.msra.mxu0 %v1297
        %1312 = vmatmul.bf16.gmra.mxu0 %v1302
        %v1313 = vpop.f32.mrf.mxu0
        %v1314 = vadd.f32 %v1287, %v1313
        %v1315 = vpop.f32.mrf.mxu0
        %1316 = vdwg.mxu0
        %v1317 = vmul.f32 %v1314, 1.702
        %v1318 = vxor.u32 %v1317, 2147483648
        %v1319 = vmul.f32 %v1318, 1.442695
        %v1320 = vpow.pop %v1319
        %v1321 = vadd.f32 %v1320, 1.0
        %v1322 = vrcp.pop %v1321
        %v1323 = vmul.f32 %v1321, %v1322
        %v1324 = vsub.f32 1.0, %v1323
        %v1325 = vmul.f32 %v1322, %v1324
        %v1326 = vadd.f32 %v1322, %v1325
        %vm1327 = vweird.f32 %v1321
        %vm1328 = vweird.f32 %v1322
        %vm1329 = vmor %vm1327, %vm1328
        %v1330 = vsel %vm1329, %v1322, %v1326
        %v1331 = vand.u32 2147483647, %v1321
        %vm1332 = vcmp.eq.f32.partialorder %v1331, 8.507059e+37
        %v1333 = vand.u32 %v1321, 2147483648
        %v1334 = vor.u32 1.1754944e-38, %v1333
        %v1335 = vsel %vm1332, %v1334, %v1330
        %v1336 = vmul.f32 1.0, %v1335
        %v1337 = vmul.f32 %v1314, %v1336
        %v1338 = vpack.c.bf16 %v1337, %v1337
        %v1339 = vld [vmem:[%s16] sm:$0xf]
        %v1340 = vld [vmem:[%s16 + $0x4] sm:$0xf]
        %v1341 = vld [vmem:[%s16 + $0x8] sm:$0xf]
        %v1342 = vld [vmem:[%s16 + $0xc] sm:$0xf]
        %v1343 = vld [vmem:[%s16 + $0x10] sm:$0xf]
        %v1344 = vld [vmem:[%s16 + $0x14] sm:$0xf]
        %v1345 = vld [vmem:[%s16 + $0x18] sm:$0xf]
        %v1346 = vld [vmem:[%s16 + $0x1c] sm:$0xf]
        %v1347 = vld [vmem:[%s16 + $0x20] sm:$0xf]
        %v1348 = vld [vmem:[%s16 + $0x24] sm:$0xf]
        %v1349 = vld [vmem:[%s16 + $0x28] sm:$0xf]
        %v1350 = vld [vmem:[%s16 + $0x2c] sm:$0xf]
        %v1351 = vld [vmem:[%s16 + $0x30] sm:$0xf]
        %v1352 = vld [vmem:[%s16 + $0x34] sm:$0xf]
        %v1353 = vld [vmem:[%s16 + $0x38] sm:$0xf]
        %v1354 = vld [vmem:[%s16 + $0x3c] sm:$0xf]
        %v1371 = vunpack.c.l.b16 %v1339
        %v1372 = vunpack.c.l.b16 %v1340
        %v1373 = vunpack.c.l.b16 %v1341
        %v1374 = vunpack.c.l.b16 %v1342
        %v1375 = vunpack.c.l.b16 %v1343
        %v1376 = vunpack.c.l.b16 %v1344
        %v1377 = vunpack.c.l.b16 %v1345
        %v1378 = vunpack.c.l.b16 %v1346
        %v1379 = vunpack.c.l.b16 %v1347
        %v1380 = vunpack.c.l.b16 %v1348
        %v1381 = vunpack.c.l.b16 %v1349
        %v1382 = vunpack.c.l.b16 %v1350
        %v1383 = vunpack.c.l.b16 %v1351
        %v1384 = vunpack.c.l.b16 %v1352
        %v1385 = vunpack.c.l.b16 %v1353
        %v1386 = vunpack.c.l.b16 %v1354
        %v1387 = vpack.c.b16 %v1372, %v1371
        %v1388 = vpack.c.b16 %v1374, %v1373
        %v1389 = vpack.c.b16 %v1376, %v1375
        %v1390 = vpack.c.b16 %v1378, %v1377
        %v1391 = vpack.c.b16 %v1380, %v1379
        %v1392 = vpack.c.b16 %v1382, %v1381
        %v1393 = vpack.c.b16 %v1384, %v1383
        %v1394 = vpack.c.b16 %v1386, %v1385
        %1403 = vmatpush.bf16.msra.mxu0 %v1394
        %1404 = vmatpush.bf16.msra.mxu0 %v1393
        %1405 = vmatpush.bf16.msra.mxu0 %v1392
        %1406 = vmatpush.bf16.msra.mxu0 %v1391
        %1407 = vmatpush.bf16.msra.mxu0 %v1390
        %1408 = vmatpush.bf16.msra.mxu0 %v1389
        %1409 = vmatpush.bf16.msra.mxu0 %v1388
        %1410 = vmatpush.bf16.msra.mxu0 %v1387
        %1411 = vmatmul.bf16.gmra.mxu0 %v1338
        %v1412 = vpop.f32.mrf.mxu0
        %v1413 = vadd.f32 0.0, %v1412
        %v1414 = vpop.f32.mrf.mxu0
        %1415 = vdwg.mxu0
        %v1416 = vadd.f32 %v1247, %v1413
        %v1417 = vld [vmem:[%s17] sm:$0x1]
        %v1419 = vperm.slane %v1417, 0
        %v1421 = vadd.f32 %v1416, %v1419
        %v1422 = vld [vmem:[%s18] sm:$0x1]
        %v1423 = vld [vmem:[%s19] sm:$0x1]
        %vm1424 = vcmask 254976
        %v1425 = vsel %vm1424, %v1421, 0.0
        %1426 = vadd.xlane.f32.xlu0 %v1425
        %v1427 = vpop.xlane.xlu0 %1426
        %v1428 = vmul.f32 %v1427, %v807
        %v1429 = vsub.f32 %v1421, %v1428
        %v1430 = vmul.f32 %v1429, %v1429
        %v1431 = vsel %vm1424, %v1430, 0.0
        %1432 = vadd.xlane.f32.xlu0 %v1431
        %v1433 = vpop.xlane.xlu0 %1432
        %v1434 = vmul.f32 %v1433, %v807
        %v1435 = vadd.f32 %v1434, 1e-05
        %v1436 = vrsqrt.pop %v1435
        %v1437 = vmul.f32 %v1436, %v1435
        %v1438 = vmul.f32 %v1437, %v1436
        %v1439 = vmul.f32 0.5, %v1438
        %v1440 = vsub.f32 1.5, %v1439
        %v1441 = vmul.f32 %v1436, %v1440
        %vm1442 = vweird.f32 %v1435
        %vm1443 = vweird.f32 %v1436
        %vm1444 = vmor %vm1442, %vm1443
        %v1445 = vsel %vm1444, %v1436, %v1441
        %v1446 = vmul.f32 %v1429, %v1445
        %v1448 = vperm.slane %v1422, 0
        %v1450 = vmul.f32 %v1446, %v1448
        %v1452 = vperm.slane %v1423, 0
        %v1454 = vadd.f32 %v1450, %v1452
        %v1455 = vpack.c.bf16 %v1454, %v1454
        %v1456 = vld [vmem:[%s20] sm:$0xf]
        %v1457 = vld [vmem:[%s20 + $0x4] sm:$0xf]
        %v1458 = vld [vmem:[%s20 + $0x8] sm:$0xf]
        %v1459 = vld [vmem:[%s20 + $0xc] sm:$0xf]
        %v1464 = vunpack.c.l.b16 %v1456
        %v1465 = vunpack.c.l.b16 %v1457
        %v1466 = vunpack.c.l.b16 %v1458
        %v1467 = vunpack.c.l.b16 %v1459
        %v1468 = vpack.c.b16 %v1465, %v1464
        %v1469 = vpack.c.b16 %v1467, %v1466
        %v1473 = vsel %vm888, %v1455, 0
        %1475 = vmatpush.bf16.msra.mxu0 0
        %1476 = vmatpush.bf16.msra.mxu0 0
        %1477 = vmatpush.bf16.msra.mxu0 0
        %1478 = vmatpush.bf16.msra.mxu0 0
        %1479 = vmatpush.bf16.msra.mxu0 0
        %1480 = vmatpush.bf16.msra.mxu0 0
        %1481 = vmatpush.bf16.msra.mxu0 %v1469
        %1482 = vmatpush.bf16.msra.mxu0 %v1468
        %1483 = vmatmul.bf16.gmra.mxu0 %v1473
        %v1484 = vpop.f32.mrf.mxu0
        %v1485 = vadd.f32 0.0, %v1484
        %v1486 = vpop.f32.mrf.mxu0
        %1487 = vdwg.mxu0
        %1488 = vst.msk [vmem:[%s649] sm:$0x3] %vm1424, %v1485
        %s1489 = sand.u32 %s489, 1
        %s1490 = scalar_lea.sflag [#allocation3], %s1489
        %s1491 = sand.u32 %s489, 1
        %s1492 = smul.addr %s1491, 2
        %s1493 = scalar_lea.vmem [#allocation2], %s1492
        // Predicated region
        $region105: #{visual_generator_forward.1} parent=103 // pred_check
          %p1494 = pneg %p499
        $region106: #{visual_generator_forward.1} parent=103 // pred_check_branch
          %1496 = sbr.rel (%p1494) target = $region108
        $region107: #{visual_generator_forward.1} parent=103 // pred_region
          %1498 = vsyncadd %s1490, 0
          %s1499 = smul.addr %s35, 2
          %s1500 = scalar_lea.hbm %s21, %s1499
          %s1502 = sshll.u32 %s1493, 4
          %s1503 = int_to_ptr.vmem [resolvable:$true] %s1502
          %s1504 = sshll.u32 %s1500, 4
          %s1505 = int_to_ptr.hbm [resolvable:$true] %s1504
          %1507 = dma.vmem_to_hbm [thread:$0]  %s1503, 32, %s1505, %s1490
        $region108: #{visual_generator_forward.1} parent=103 // pred_fallthru
          _
      $region104: #{visual_generator_forward.1} parent=5 // pred_fallthru
        _
      %p1508 = scmp.le.s32.totalorder 2, %s30
      // Predicated region
      $region109: #{visual_generator_forward.1} parent=5 // pred_check
        %p1509 = pneg %p1508
      $region110: #{visual_generator_forward.1} parent=5 // pred_check_branch
        %1511 = sbr.rel (%p1509) target = $region112
      $region111: #{visual_generator_forward.1} parent=5 // pred_region
        %s1512 = ssub.s32 %s30, 2
        // Predicated region
        $region113: #{visual_generator_forward.1} parent=111 // pred_check
          %p1513 = pneg %p505
        $region114: #{visual_generator_forward.1} parent=111 // pred_check_branch
          %1515 = sbr.rel (%p1513) target = $region116
        $region115: #{visual_generator_forward.1} parent=111 // pred_region
          %s1516 = sand.u32 %s490, 1
          %s1517 = scalar_lea.sflag [#allocation3], %s1516
          %s1518 = sand.u32 %s490, 1
          %s1519 = smul.addr %s1518, 2
          %s1520 = scalar_lea.vmem [#allocation2], %s1519
          %1522 = dma.done %s1517, 32
        $region116: #{visual_generator_forward.1} parent=111 // pred_fallthru
          _
      $region112: #{visual_generator_forward.1} parent=5 // pred_fallthru
        _
    $region6: #{visual_generator_forward.1} parent=1 // loop_footer
      %s34 = sadd.s32 1, %s30
    $region7: #{visual_generator_forward.1} parent=1 // loop_footer_branch
      %29 = sbr.rel target = $region3
    $region8: #{visual_generator_forward.1} parent=1 // loop_exit
      _
    %1523 = vsyncpa [#allocation3], 1
    %s1524 = scalar_lea.sflag [#allocation3], 1
    %1525 = vsyncpa %s1524, 1

</llo_original>
